<compile_context>
chip_gen: v5e
topology: v5e:2x2
jax: 0.10.0
libtpu: 0.0.40
codegen_flags: <defaults>
</compile_context>

<pallas_src>
import jax
import jax.numpy as jnp
from jax.experimental import pallas as pl
from jax.experimental.pallas import tpu as pltpu

C1 = 64   # conv1/conv2 output channels
K = 3     # kernel size (padding = 1)


def _banded_conv_weight(w, in_len, out_positions, dtype):
    """w: (K, Cin, Cout) conv taps; tap k reads input position l + k - K//2.

    Returns a dense (in_len*Cin, n_pos*Cout) block-banded matrix W such that
    (x.reshape(B, in_len*Cin) @ W)[:, j*Cout:(j+1)*Cout] equals the
    'same'-padded conv output at position out_positions[j].  Batch-independent
    (only depends on the weights and L) -> cache / constant-fold under jit.
    """
    K_, Cin, Cout = w.shape
    cols = []
    for l in out_positions:
        col = jnp.zeros((in_len * Cin, Cout), w.dtype)
        for k in range(K_):
            m = l + k - (K_ // 2)
            if 0 <= m < in_len:
                col = col.at[m * Cin:(m + 1) * Cin, :].set(w[k])
        cols.append(col)
    return jnp.concatenate(cols, axis=1).astype(dtype)


def cnn1d_kernel(x_ref, w1e_ref, w1o_ref, b1_ref, w2_ref, b2_ref,
                 wf_ref, bf_ref, out_ref):
    cdt = w1e_ref.dtype                      # MXU operand dtype (bf16 default)
    c1 = wf_ref.shape[1]                     # 64
    n_pos = b2_ref.shape[1] // c1            # L2 pooled positions

    # conv1 + bias + ReLU + MaxPool1d(2), all lane-dense: even / odd output
    # positions come from two block-banded matmuls; their pairwise max is the
    # stride-2 pool (max(relu(a+b1), relu(b+b1)) == relu(max(a,b)+b1)).
    x2 = x_ref[...].astype(cdt)                                    # (bt, L*F)
    ye = jnp.dot(x2, w1e_ref[...], preferred_element_type=jnp.float32)
    yo = jnp.dot(x2, w1o_ref[...], preferred_element_type=jnp.float32)
    pooled = jnp.maximum(jnp.maximum(ye, yo) + b1_ref[...], 0.0)   # (bt, L2*64)

    # conv2 + bias + ReLU: one block-banded matmul over all pooled positions
    # (zero bands encode the zero padding at the sequence edges).
    y2 = jnp.dot(pooled.astype(cdt), w2_ref[...],
                 preferred_element_type=jnp.float32) + b2_ref[...]
    y2 = jnp.maximum(y2, 0.0)                                      # (bt, L2*64)

    # AdaptiveMaxPool1d(1): global max over position blocks (static lane slices).
    h = y2[:, :c1]
    for q in range(1, n_pos):
        h = jnp.maximum(h, y2[:, q * c1:(q + 1) * c1])             # (bt, 64)

    # Dropout(0.3) is identity in eval / inference mode.
    # fc (Linear 64->1) + Sigmoid, emitted as a lane-dense (1, bt) row:
    # dot_general contracts both channel dims -> (1, bt), no transpose needed.
    logits = jax.lax.dot_general(
        wf_ref[...], h, (((1,), (1,)), ((), ())),
        preferred_element_type=jnp.float32) + bf_ref[0, 0]         # (1, bt)
    out_ref[0] = 1.0 / (1.0 + jnp.exp(-logits))


def cnn1d_forward(x, params, *, bt=None, compute_dtype=jnp.bfloat16):
    """x: (B, L, F) float32.  Returns (B,) float32 sigmoid outputs."""
    w1, b1, w2, b2, wf, bf = params
    B, L, F = x.shape
    assert L % 2 == 0 and L >= 4, "seq_len must be even (MaxPool1d(2)) and >= 4"
    assert w1.shape == (K, F, C1) and w2.shape == (K, C1, C1)
    L2 = L // 2
    # Banded-weight formulation targets short sequences (conv2 weight is O(L^2)).
    assert L2 * C1 <= 4096, "sequence too long for dense banded conv2 weight"
    # TODO(synk): for long sequences, tile L on the grid with halo'd blocks
    # instead of the dense banded conv2 weight.

    # Batch tile: >=2 grid steps when possible (v7x has 2 TensorCores); rows a
    # multiple of 8 (sublane-aligned x block) and of 128 when large so the
    # (1, 1, bt) output row stores unmasked / lane-dense.
    if bt is None:
        bt = min(512, B)
        if B > 1 and pl.cdiv(B, bt) < 2:
            bt = pl.cdiv(B, 2)
    align = 128 if bt >= 128 else 8
    bt = ((bt + align - 1) // align) * align
    G = pl.cdiv(B, bt)
    Bp = G * bt

    # Lane-dense 2-D view of the raw input (free bitcast): (B, L*F).  No
    # im2col, no pad HLO, no wrapper cast -> x moves HBM->VMEM exactly once in
    # f32; MXU operands are cast to `compute_dtype` inside the kernel.
    x2d = x.reshape(B, L * F)
    if Bp != B:
        x2d = jnp.pad(x2d, ((0, Bp - B), (0, 0)))

    # Block-banded conv weights + position-tiled biases (batch independent).
    w1e = _banded_conv_weight(w1, L, range(0, L, 2), compute_dtype)   # (L*F, L2*C1)
    w1o = _banded_conv_weight(w1, L, range(1, L, 2), compute_dtype)   # (L*F, L2*C1)
    w2b = _banded_conv_weight(w2, L2, range(L2), compute_dtype)       # (L2*C1, L2*C1)
    b1b = jnp.tile(b1.astype(jnp.float32), (1, L2))                   # (1, L2*C1)
    b2b = jnp.tile(b2.astype(jnp.float32), (1, L2))                   # (1, L2*C1)
    wfr = wf.astype(jnp.float32)
    bfr = bf.astype(jnp.float32)

    out = pl.pallas_call(
        cnn1d_kernel,
        out_shape=jax.ShapeDtypeStruct((G, 1, bt), jnp.float32),
        grid_spec=pltpu.PrefetchScalarGridSpec(
            num_scalar_prefetch=0,
            grid=(G,),
            in_specs=[
                # x tile, lane-dense.  (If the x DMA ever shows up exposed on
                # v5e, add pipeline_mode=pl.Buffered(3) here.)
                pl.BlockSpec((bt, L * F), lambda i: (i, 0)),
                pl.BlockSpec((L * F, L2 * C1), lambda i: (0, 0)),     # conv1 even-pos W
                pl.BlockSpec((L * F, L2 * C1), lambda i: (0, 0)),     # conv1 odd-pos W
                pl.BlockSpec((1, L2 * C1), lambda i: (0, 0)),         # conv1 bias (tiled)
                pl.BlockSpec((L2 * C1, L2 * C1), lambda i: (0, 0)),   # conv2 banded W
                pl.BlockSpec((1, L2 * C1), lambda i: (0, 0)),         # conv2 bias (tiled)
                pl.BlockSpec((1, C1), lambda i: (0, 0)),              # fc weight
                pl.BlockSpec((1, 1), lambda i: (0, 0)),               # fc bias
            ],
            out_specs=pl.BlockSpec((1, 1, bt), lambda i: (i, 0, 0)),  # lane-dense row
        ),
        compiler_params=pltpu.CompilerParams(
            dimension_semantics=("parallel",),
            vmem_limit_bytes=32 * 1024 * 1024),
    )(x2d, w1e, w1o, b1b, w2b, b2b, wfr, bfr)
    return out.reshape(Bp)[:B]


def init_params(key, features):
    k1, k2, k3, k4, k5, k6 = jax.random.split(key, 6)
    w1 = jax.random.normal(k1, (K, features, C1), jnp.float32) * 0.2
    b1 = jax.random.normal(k2, (1, C1), jnp.float32) * 0.05
    w2 = jax.random.normal(k3, (K, C1, C1), jnp.float32) * 0.1
    b2 = jax.random.normal(k4, (1, C1), jnp.float32) * 0.05
    wf = jax.random.normal(k5, (1, C1), jnp.float32) * 0.1
    bf = jax.random.normal(k6, (1, 1), jnp.float32) * 0.05
    return (w1, b1, w2, b2, wf, bf)


def reference(x, params):
    """Pure-JAX reference matching the PyTorch forward (eval mode)."""
    w1, b1, w2, b2, wf, bf = params
    B, L, F = x.shape
    L2 = L // 2
    xp = jnp.pad(x, ((0, 0), (1, 1), (0, 0)))
    y1 = sum(jnp.einsum('blf,fo->blo', xp[:, k:k + L], w1[k]) for k in range(K)) + b1
    y1 = jax.nn.relu(y1)
    y1p = jnp.max(y1.reshape(B, L2, 2, C1), axis=2)
    yp = jnp.pad(y1p, ((0, 0), (1, 1), (0, 0)))
    y2 = sum(jnp.einsum('blf,fo->blo', yp[:, k:k + L2], w2[k]) for k in range(K)) + b2
    y2 = jax.nn.relu(y2)
    h = jnp.max(y2, axis=1)                                  # (B, 64)
    logit = jnp.sum(h * wf, axis=-1) + bf[0, 0]
    return jax.nn.sigmoid(logit)


if __name__ == "__main__":
    B, L, F = 10, 16, 4        # batch, seq_len, features (L even for MaxPool1d(2))
    key = jax.random.PRNGKey(0)
    kx, kp = jax.random.split(key)
    x = jax.random.normal(kx, (B, L, F), jnp.float32)
    params = init_params(kp, F)

    ref = reference(x, params)

    # f32 MXU path, explicit bt=8 -> 2 grid steps, exercises batch padding.
    out_f32 = jax.block_until_ready(
        cnn1d_forward(x, params, bt=8, compute_dtype=jnp.float32))
    assert out_f32.shape == (B,), out_f32.shape
    assert jnp.allclose(out_f32, ref, atol=1e-4, rtol=1e-4), (out_f32, ref)

    # Default path: bf16 MXU operands (all generations), auto batch tiling
    # (heuristic picks bt=8 -> G=2), f32 accumulation + f32 epilogue.
    out_bf16 = jax.block_until_ready(cnn1d_forward(x, params))
    assert out_bf16.shape == (B,), out_bf16.shape
    assert jnp.allclose(out_bf16, ref, atol=3e-2, rtol=3e-2), (out_bf16, ref)

    print("KERNEL_OK")
</pallas_src>

<mosaic_0001>
module attributes {stable_mosaic.version = 11 : i64} {
  func.func @cnn1d_kernel(%arg0: i32, %arg1: memref<8x64xf32, #tpu.memory_space<vmem>>, %arg2: memref<64x512xf32, #tpu.memory_space<vmem>>, %arg3: memref<64x512xf32, #tpu.memory_space<vmem>>, %arg4: memref<1x512xf32, #tpu.memory_space<vmem>>, %arg5: memref<512x512xf32, #tpu.memory_space<vmem>>, %arg6: memref<1x512xf32, #tpu.memory_space<vmem>>, %arg7: memref<1x64xf32, #tpu.memory_space<vmem>>, %arg8: memref<1x1xf32, #tpu.memory_space<vmem>>, %arg9: memref<1x1x8xf32, #tpu.memory_space<vmem>>) attributes {dimension_semantics = [#tpu.dimension_semantics<parallel>], iteration_bounds = array<i64: 2>, scalar_prefetch = 0 : i64, scratch_operands = 0 : i64, tpu.core_type = #tpu.core_type<tc>, window_params = [{transform_indices = @transform_0, window_bounds = array<i64: 8, 64>}, {pipeline_mode = #tpu.pipeline_mode<synchronous>, transform_indices = @transform_1, window_bounds = array<i64: 64, 512>}, {pipeline_mode = #tpu.pipeline_mode<synchronous>, transform_indices = @transform_2, window_bounds = array<i64: 64, 512>}, {pipeline_mode = #tpu.pipeline_mode<synchronous>, transform_indices = @transform_3, window_bounds = array<i64: 1, 512>}, {pipeline_mode = #tpu.pipeline_mode<synchronous>, transform_indices = @transform_4, window_bounds = array<i64: 512, 512>}, {pipeline_mode = #tpu.pipeline_mode<synchronous>, transform_indices = @transform_5, window_bounds = array<i64: 1, 512>}, {pipeline_mode = #tpu.pipeline_mode<synchronous>, transform_indices = @transform_6, window_bounds = array<i64: 1, 64>}, {pipeline_mode = #tpu.pipeline_mode<synchronous>, transform_indices = @transform_7, window_bounds = array<i64: 1, 1>}, {transform_indices = @transform_8, window_bounds = array<i64: 1, 1, 8>}]} {
    %c0 = arith.constant 0 : index
    %c0_0 = arith.constant 0 : index
    %0 = vector.load %arg1[%c0, %c0_0] : memref<8x64xf32, #tpu.memory_space<vmem>>, vector<8x64xf32>
    %c0_1 = arith.constant 0 : index
    %c0_2 = arith.constant 0 : index
    %1 = vector.load %arg2[%c0_1, %c0_2] : memref<64x512xf32, #tpu.memory_space<vmem>>, vector<64x512xf32>
    %cst = arith.constant dense<0.000000e+00> : vector<8x512xf32>
    %2 = tpu.matmul %0, %1, %cst {dimension_numbers = #tpu.dot_dimension_numbers<[1], [0], [0], [1], [0, 0, 1, 1], [], []>} : vector<8x64xf32>, vector<64x512xf32>, vector<8x512xf32> -> vector<8x512xf32>
    %c0_3 = arith.constant 0 : index
    %c0_4 = arith.constant 0 : index
    %3 = vector.load %arg3[%c0_3, %c0_4] : memref<64x512xf32, #tpu.memory_space<vmem>>, vector<64x512xf32>
    %cst_5 = arith.constant dense<0.000000e+00> : vector<8x512xf32>
    %4 = tpu.matmul %0, %3, %cst_5 {dimension_numbers = #tpu.dot_dimension_numbers<[1], [0], [0], [1], [0, 0, 1, 1], [], []>} : vector<8x64xf32>, vector<64x512xf32>, vector<8x512xf32> -> vector<8x512xf32>
    %5 = arith.maximumf %2, %4 : vector<8x512xf32>
    %c0_6 = arith.constant 0 : index
    %c0_7 = arith.constant 0 : index
    %6 = vector.load %arg4[%c0_6, %c0_7] : memref<1x512xf32, #tpu.memory_space<vmem>>, vector<1x512xf32>
    %7 = vector.broadcast %6 : vector<1x512xf32> to vector<8x512xf32>
    %8 = arith.addf %5, %7 : vector<8x512xf32>
    %cst_8 = arith.constant 0.000000e+00 : f32
    %9 = vector.broadcast %cst_8 : f32 to vector<8x512xf32>
    %10 = arith.maximumf %8, %9 : vector<8x512xf32>
    %c0_9 = arith.constant 0 : index
    %c0_10 = arith.constant 0 : index
    %11 = vector.load %arg5[%c0_9, %c0_10] : memref<512x512xf32, #tpu.memory_space<vmem>>, vector<512x512xf32>
    %cst_11 = arith.constant dense<0.000000e+00> : vector<8x512xf32>
    %12 = tpu.matmul %10, %11, %cst_11 {dimension_numbers = #tpu.dot_dimension_numbers<[1], [0], [0], [1], [0, 0, 1, 1], [], []>} : vector<8x512xf32>, vector<512x512xf32>, vector<8x512xf32> -> vector<8x512xf32>
    %c0_12 = arith.constant 0 : index
    %c0_13 = arith.constant 0 : index
    %13 = vector.load %arg6[%c0_12, %c0_13] : memref<1x512xf32, #tpu.memory_space<vmem>>, vector<1x512xf32>
    %14 = vector.broadcast %13 : vector<1x512xf32> to vector<8x512xf32>
    %15 = arith.addf %12, %14 : vector<8x512xf32>
    %cst_14 = arith.constant 0.000000e+00 : f32
    %16 = vector.broadcast %cst_14 : f32 to vector<8x512xf32>
    %17 = arith.maximumf %15, %16 : vector<8x512xf32>
    %18 = vector.extract_strided_slice %17 {offsets = [0, 0], sizes = [8, 64], strides = [1, 1]} : vector<8x512xf32> to vector<8x64xf32>
    %19 = vector.extract_strided_slice %17 {offsets = [0, 64], sizes = [8, 64], strides = [1, 1]} : vector<8x512xf32> to vector<8x64xf32>
    %20 = arith.maximumf %18, %19 : vector<8x64xf32>
    %21 = vector.extract_strided_slice %17 {offsets = [0, 128], sizes = [8, 64], strides = [1, 1]} : vector<8x512xf32> to vector<8x64xf32>
    %22 = arith.maximumf %20, %21 : vector<8x64xf32>
    %23 = vector.extract_strided_slice %17 {offsets = [0, 192], sizes = [8, 64], strides = [1, 1]} : vector<8x512xf32> to vector<8x64xf32>
    %24 = arith.maximumf %22, %23 : vector<8x64xf32>
    %25 = vector.extract_strided_slice %17 {offsets = [0, 256], sizes = [8, 64], strides = [1, 1]} : vector<8x512xf32> to vector<8x64xf32>
    %26 = arith.maximumf %24, %25 : vector<8x64xf32>
    %27 = vector.extract_strided_slice %17 {offsets = [0, 320], sizes = [8, 64], strides = [1, 1]} : vector<8x512xf32> to vector<8x64xf32>
    %28 = arith.maximumf %26, %27 : vector<8x64xf32>
    %29 = vector.extract_strided_slice %17 {offsets = [0, 384], sizes = [8, 64], strides = [1, 1]} : vector<8x512xf32> to vector<8x64xf32>
    %30 = arith.maximumf %28, %29 : vector<8x64xf32>
    %31 = vector.extract_strided_slice %17 {offsets = [0, 448], sizes = [8, 64], strides = [1, 1]} : vector<8x512xf32> to vector<8x64xf32>
    %32 = arith.maximumf %30, %31 : vector<8x64xf32>
    %c0_15 = arith.constant 0 : index
    %c0_16 = arith.constant 0 : index
    %33 = vector.load %arg7[%c0_15, %c0_16] : memref<1x64xf32, #tpu.memory_space<vmem>>, vector<1x64xf32>
    %cst_17 = arith.constant dense<0.000000e+00> : vector<1x8xf32>
    %34 = tpu.matmul %33, %32, %cst_17 {dimension_numbers = #tpu.dot_dimension_numbers<[1], [1], [0], [0], [0, 0, 1, 0], [], []>} : vector<1x64xf32>, vector<8x64xf32>, vector<1x8xf32> -> vector<1x8xf32>
    %c0_18 = arith.constant 0 : index
    %c0_19 = arith.constant 0 : index
    %35 = vector.load %arg8[%c0_18, %c0_19] : memref<1x1xf32, #tpu.memory_space<vmem>>, vector<1x1xf32>
    %36 = vector.extract %35[0, 0] : f32 from vector<1x1xf32>
    %37 = vector.broadcast %36 : f32 to vector<1x8xf32>
    %38 = arith.addf %34, %37 : vector<1x8xf32>
    %cst_20 = arith.constant 0.000000e+00 : f32
    %39 = vector.broadcast %cst_20 : f32 to vector<1x8xf32>
    %40 = arith.subf %39, %38 : vector<1x8xf32>
    %41 = math.exp %40 : vector<1x8xf32>
    %cst_21 = arith.constant 1.000000e+00 : f32
    %42 = vector.broadcast %cst_21 : f32 to vector<1x8xf32>
    %43 = arith.addf %42, %41 : vector<1x8xf32>
    %cst_22 = arith.constant 1.000000e+00 : f32
    %44 = vector.broadcast %cst_22 : f32 to vector<1x8xf32>
    %45 = arith.divf %44, %43 : vector<1x8xf32>
    %c0_23 = arith.constant 0 : index
    %c0_24 = arith.constant 0 : index
    %c0_25 = arith.constant 0 : index
    %46 = vector.load %arg9[%c0_23, %c0_24, %c0_25] : memref<1x1x8xf32, #tpu.memory_space<vmem>>, vector<1x1x8xf32>
    %47 = vector.shape_cast %46 : vector<1x1x8xf32> to vector<1x8xf32>
    %48 = vector.shape_cast %45 : vector<1x8xf32> to vector<1x1x8xf32>
    tpu.vector_store %arg9[%c0_23, %c0_24, %c0_25], %48 {strides = array<i32>} : memref<1x1x8xf32, #tpu.memory_space<vmem>>, vector<1x1x8xf32>,
    return
  }
  func.func @transform_0(%arg0: i32) -> (i32, i32) {
    %c0_i32 = arith.constant 0 : i32
    %c0_i32_0 = arith.constant 0 : i32
    return %arg0, %c0_i32 : i32, i32
  }
  func.func @transform_1(%arg0: i32) -> (i32, i32) {
    %c0_i32 = arith.constant 0 : i32
    %c0_i32_0 = arith.constant 0 : i32
    %c0_i32_1 = arith.constant 0 : i32
    return %c0_i32, %c0_i32_0 : i32, i32
  }
  func.func @transform_2(%arg0: i32) -> (i32, i32) {
    %c0_i32 = arith.constant 0 : i32
    %c0_i32_0 = arith.constant 0 : i32
    %c0_i32_1 = arith.constant 0 : i32
    return %c0_i32, %c0_i32_0 : i32, i32
  }
  func.func @transform_3(%arg0: i32) -> (i32, i32) {
    %c0_i32 = arith.constant 0 : i32
    %c0_i32_0 = arith.constant 0 : i32
    %c0_i32_1 = arith.constant 0 : i32
    return %c0_i32, %c0_i32_0 : i32, i32
  }
  func.func @transform_4(%arg0: i32) -> (i32, i32) {
    %c0_i32 = arith.constant 0 : i32
    %c0_i32_0 = arith.constant 0 : i32
    %c0_i32_1 = arith.constant 0 : i32
    return %c0_i32, %c0_i32_0 : i32, i32
  }
  func.func @transform_5(%arg0: i32) -> (i32, i32) {
    %c0_i32 = arith.constant 0 : i32
    %c0_i32_0 = arith.constant 0 : i32
    %c0_i32_1 = arith.constant 0 : i32
    return %c0_i32, %c0_i32_0 : i32, i32
  }
  func.func @transform_6(%arg0: i32) -> (i32, i32) {
    %c0_i32 = arith.constant 0 : i32
    %c0_i32_0 = arith.constant 0 : i32
    %c0_i32_1 = arith.constant 0 : i32
    return %c0_i32, %c0_i32_0 : i32, i32
  }
  func.func @transform_7(%arg0: i32) -> (i32, i32) {
    %c0_i32 = arith.constant 0 : i32
    %c0_i32_0 = arith.constant 0 : i32
    %c0_i32_1 = arith.constant 0 : i32
    return %c0_i32, %c0_i32_0 : i32, i32
  }
  func.func @transform_8(%arg0: i32) -> (i32, i32, i32) {
    %c0_i32 = arith.constant 0 : i32
    %c0_i32_0 = arith.constant 0 : i32
    %c0_i32_1 = arith.constant 0 : i32
    return %arg0, %c0_i32, %c0_i32_0 : i32, i32, i32
  }
}

</mosaic_0001>

<llo_original>
// kernel: tpu_custom_call.1
$region0: #{tpu_custom_call.1}
  #allocation0 [shape = 'u32[]', space=smem, size = 0x4, offset = 0x4, fixed_abs, tag = 'smem constant byte address 0x4 - core index']
  #allocation1 [shape = 'u32[72,128]{1,0:T(1,128)}', space=vmem, size = 0x9000, scoped, tag = 'internal scratch']
  #allocation2 [shape = 'f32[1,1]{1,0:T(1,128)S(1)}', space=vmem, size = 0x200, scoped, tag = 'scoped memory for tpu_custom_call.1']
  %s0 = inlined_call_operand.hbm [shape: f32[16,64], index: 0, kind: input, shape index: {}]
  %s1 = inlined_call_operand.hbm [shape: f32[64,512], index: 1, kind: input, shape index: {}]
  %s2 = inlined_call_operand.hbm [shape: f32[64,512], index: 2, kind: input, shape index: {}]
  %s3 = inlined_call_operand.vmem [shape: f32[1,512], index: 3, kind: input, shape index: {}]
  %s4 = inlined_call_operand.hbm [shape: f32[512,512], index: 4, kind: input, shape index: {}]
  %s5 = inlined_call_operand.hbm [shape: f32[1,512], index: 5, kind: input, shape index: {}]
  %s6 = inlined_call_operand.vmem [shape: f32[1,64], index: 6, kind: input, shape index: {}]
  %s7 = inlined_call_operand.<no memory space> [shape: f32[1,1], index: 7, kind: input, shape index: {}]
  %s8 = inlined_call_operand.hbm [shape: f32[2,1,8], index: 8, kind: output, shape index: {}]
  %s9 = sld [smem:[#allocation0]]
  $region85: #{tpu_custom_call.1} parent=0
    _
  %s11 = ssub.s32 1, %s9
  %s12 = scalar_select 0, %s11, %s9
  %v13 = vstv %s7
  %14 = vst [vmem:[#allocation2] sm:$0x1] %v13
  $region1: #{tpu_custom_call.1} parent=0
    #allocation3 [shape = 'u8[8192]{0}', space=vmem, size = 0x2000, scoped, tag = 'input window, operand 0']
    #allocation4 [shape = 's32[2]{0}', space=sflag, size = 0x8, scoped, tag = 'scoped memory for tpu_custom_call.1']
    #allocation5 [shape = 's32[2]{0}', space=sflag, size = 0x8, scoped, tag = 'scoped memory for tpu_custom_call.1']
    #allocation6 [shape = 'u8[131072]{0}', space=vmem, size = 0x20000, scoped, tag = 'input window, operand 1, single buffered']
    #allocation7 [shape = 's32[1]{0}', space=sflag, size = 0x4, scoped, tag = 'scoped memory for tpu_custom_call.1']
    #allocation8 [shape = 'u8[131072]{0}', space=vmem, size = 0x20000, scoped, tag = 'input window, operand 2, single buffered']
    #allocation9 [shape = 'u8[1048576]{0}', space=vmem, size = 0x100000, scoped, tag = 'input window, operand 4, single buffered']
    #allocation10 [shape = 's32[1]{0}', space=sflag, size = 0x4, scoped, tag = 'scoped memory for tpu_custom_call.1']
    #allocation11 [shape = 'u8[2048]{0}', space=vmem, size = 0x800, scoped, tag = 'input window, operand 5, single buffered']
    #allocation12 [shape = 'u8[1024]{0}', space=vmem, size = 0x400, scoped, tag = 'output window, operand 0']
    %15 = vsyncpa [#allocation4], 0
    %s16 = scalar_lea.sflag [#allocation4], 1
    %17 = vsyncpa %s16, 0
    %18 = vsyncpa [#allocation7], 0
    %19 = vsyncpa [#allocation10], 0
    %20 = vsyncpa [#allocation5], 0
    %s21 = scalar_lea.sflag [#allocation5], 1
    %22 = vsyncpa %s21, 0
    loop: start=0, step=1, limit=4
    $region2: #{tpu_custom_call.1} parent=1 // loop_pre_header
      _
    $region3: #{tpu_custom_call.1} parent=1 // loop_header
      %s24 = sphi 0, %s28
      %p25 = scmp.ge.s32.totalorder %s24, 4
      %s34 = sphi 0, %s36
      %s37 = sphi 0, %s34
      %s38 = sphi 0, %s37
      %s54 = sphi 0, %s38
      %s58 = sphi 0, %s58
      %s60 = sphi 0, %s58
      %s61 = sphi 0, %s60
      %s75 = sphi 0, %s61
      %s79 = sphi 0, %s79
      %s81 = sphi 0, %s79
      %s82 = sphi 0, %s81
      %s96 = sphi 0, %s82
      %s100 = sphi 0, %s100
      %s102 = sphi 0, %s100
      %s103 = sphi 0, %s102
      %s117 = sphi 0, %s103
      %s121 = sphi 0, %s121
      %s123 = sphi 0, %s121
      %s124 = sphi 0, %s123
      %s138 = sphi 0, %s124
      %s142 = sphi 0, %s142
      %s144 = sphi 0, %s142
      %s145 = sphi 0, %s144
      %s159 = sphi 0, %s145
      %s163 = sphi 0, %s163
      %s165 = sphi 0, %s163
      %s166 = sphi 0, %s165
      %s180 = sphi 0, %s166
      %s184 = sphi 0, %s184
      %s186 = sphi 0, %s184
      %s187 = sphi 0, %s186
      %s201 = sphi 0, %s187
      %s207 = sphi 0, %s209
      %s210 = sphi 0, %s207
      %s211 = sphi 0, %s210
      %s227 = sphi 0, %s211
    $region4: #{tpu_custom_call.1} parent=1 // loop_header_branch
      %27 = sbr.rel (%p25) target = $region8
    $region5: #{tpu_custom_call.1} parent=1 // loop_body
      %s29 = ssub.s32 %s24, 1
      %s30 = ssub.s32 %s24, 2
      %s31 = sadd.s32 %s24, 1
      %s32 = ssub.s32 %s24, %s31
      %p33 = scmp.eq.s32.totalorder %s32, 0
      %s35 = sadd.s32 %s34, 1
      %s36 = scalar_select %p33, %s34, %s35
      %p39 = pneg %p33
      %p40 = scmp.eq.s32.totalorder %s24, 1
      %p41 = por %p39, %p40
      %p42 = scmp.ne.s32.totalorder %s34, %s37
      %p43 = scmp.eq.s32.totalorder %s24, 0
      %p44 = por %p42, %p43
      %p45 = scmp.ne.s32.totalorder %s34, %s37
      %p46 = scmp.eq.s32.totalorder %s29, 1
      %p47 = por %p45, %p46
      %p48 = scmp.ne.s32.totalorder %s37, %s38
      %p49 = scmp.eq.s32.totalorder %s29, 0
      %p50 = por %p48, %p49
      %p51 = scmp.ne.s32.totalorder %s37, %s38
      %p52 = scmp.eq.s32.totalorder %s30, 1
      %p53 = por %p51, %p52
      %p55 = scmp.ne.s32.totalorder %s38, %s54
      %p56 = scmp.eq.s32.totalorder %s30, 0
      %p57 = por %p55, %p56
      %s59 = sadd.s32 %s58, 1
      %p62 = scmp.eq.s32.totalorder %s24, 1
      %p63 = scmp.ne.s32.totalorder %s58, %s60
      %p64 = scmp.eq.s32.totalorder %s24, 0
      %p65 = por %p63, %p64
      %p66 = scmp.ne.s32.totalorder %s58, %s60
      %p67 = scmp.eq.s32.totalorder %s29, 1
      %p68 = por %p66, %p67
      %p69 = scmp.ne.s32.totalorder %s60, %s61
      %p70 = scmp.eq.s32.totalorder %s29, 0
      %p71 = por %p69, %p70
      %p72 = scmp.ne.s32.totalorder %s60, %s61
      %p73 = scmp.eq.s32.totalorder %s30, 1
      %p74 = por %p72, %p73
      %p76 = scmp.ne.s32.totalorder %s61, %s75
      %p77 = scmp.eq.s32.totalorder %s30, 0
      %p78 = por %p76, %p77
      %s80 = sadd.s32 %s79, 1
      %p83 = scmp.eq.s32.totalorder %s24, 1
      %p84 = scmp.ne.s32.totalorder %s79, %s81
      %p85 = scmp.eq.s32.totalorder %s24, 0
      %p86 = por %p84, %p85
      %p87 = scmp.ne.s32.totalorder %s79, %s81
      %p88 = scmp.eq.s32.totalorder %s29, 1
      %p89 = por %p87, %p88
      %p90 = scmp.ne.s32.totalorder %s81, %s82
      %p91 = scmp.eq.s32.totalorder %s29, 0
      %p92 = por %p90, %p91
      %p93 = scmp.ne.s32.totalorder %s81, %s82
      %p94 = scmp.eq.s32.totalorder %s30, 1
      %p95 = por %p93, %p94
      %p97 = scmp.ne.s32.totalorder %s82, %s96
      %p98 = scmp.eq.s32.totalorder %s30, 0
      %p99 = por %p97, %p98
      %s101 = sadd.s32 %s100, 1
      %p104 = scmp.eq.s32.totalorder %s24, 1
      %p105 = scmp.ne.s32.totalorder %s100, %s102
      %p106 = scmp.eq.s32.totalorder %s24, 0
      %p107 = por %p105, %p106
      %p108 = scmp.ne.s32.totalorder %s100, %s102
      %p109 = scmp.eq.s32.totalorder %s29, 1
      %p110 = por %p108, %p109
      %p111 = scmp.ne.s32.totalorder %s102, %s103
      %p112 = scmp.eq.s32.totalorder %s29, 0
      %p113 = por %p111, %p112
      %p114 = scmp.ne.s32.totalorder %s102, %s103
      %p115 = scmp.eq.s32.totalorder %s30, 1
      %p116 = por %p114, %p115
      %p118 = scmp.ne.s32.totalorder %s103, %s117
      %p119 = scmp.eq.s32.totalorder %s30, 0
      %p120 = por %p118, %p119
      %s122 = sadd.s32 %s121, 1
      %p125 = scmp.eq.s32.totalorder %s24, 1
      %p126 = scmp.ne.s32.totalorder %s121, %s123
      %p127 = scmp.eq.s32.totalorder %s24, 0
      %p128 = por %p126, %p127
      %p129 = scmp.ne.s32.totalorder %s121, %s123
      %p130 = scmp.eq.s32.totalorder %s29, 1
      %p131 = por %p129, %p130
      %p132 = scmp.ne.s32.totalorder %s123, %s124
      %p133 = scmp.eq.s32.totalorder %s29, 0
      %p134 = por %p132, %p133
      %p135 = scmp.ne.s32.totalorder %s123, %s124
      %p136 = scmp.eq.s32.totalorder %s30, 1
      %p137 = por %p135, %p136
      %p139 = scmp.ne.s32.totalorder %s124, %s138
      %p140 = scmp.eq.s32.totalorder %s30, 0
      %p141 = por %p139, %p140
      %s143 = sadd.s32 %s142, 1
      %p146 = scmp.eq.s32.totalorder %s24, 1
      %p147 = scmp.ne.s32.totalorder %s142, %s144
      %p148 = scmp.eq.s32.totalorder %s24, 0
      %p149 = por %p147, %p148
      %p150 = scmp.ne.s32.totalorder %s142, %s144
      %p151 = scmp.eq.s32.totalorder %s29, 1
      %p152 = por %p150, %p151
      %p153 = scmp.ne.s32.totalorder %s144, %s145
      %p154 = scmp.eq.s32.totalorder %s29, 0
      %p155 = por %p153, %p154
      %p156 = scmp.ne.s32.totalorder %s144, %s145
      %p157 = scmp.eq.s32.totalorder %s30, 1
      %p158 = por %p156, %p157
      %p160 = scmp.ne.s32.totalorder %s145, %s159
      %p161 = scmp.eq.s32.totalorder %s30, 0
      %p162 = por %p160, %p161
      %s164 = sadd.s32 %s163, 1
      %p167 = scmp.eq.s32.totalorder %s24, 1
      %p168 = scmp.ne.s32.totalorder %s163, %s165
      %p169 = scmp.eq.s32.totalorder %s24, 0
      %p170 = por %p168, %p169
      %p171 = scmp.ne.s32.totalorder %s163, %s165
      %p172 = scmp.eq.s32.totalorder %s29, 1
      %p173 = por %p171, %p172
      %p174 = scmp.ne.s32.totalorder %s165, %s166
      %p175 = scmp.eq.s32.totalorder %s29, 0
      %p176 = por %p174, %p175
      %p177 = scmp.ne.s32.totalorder %s165, %s166
      %p178 = scmp.eq.s32.totalorder %s30, 1
      %p179 = por %p177, %p178
      %p181 = scmp.ne.s32.totalorder %s166, %s180
      %p182 = scmp.eq.s32.totalorder %s30, 0
      %p183 = por %p181, %p182
      %s185 = sadd.s32 %s184, 1
      %p188 = scmp.eq.s32.totalorder %s24, 1
      %p189 = scmp.ne.s32.totalorder %s184, %s186
      %p190 = scmp.eq.s32.totalorder %s24, 0
      %p191 = por %p189, %p190
      %p192 = scmp.ne.s32.totalorder %s184, %s186
      %p193 = scmp.eq.s32.totalorder %s29, 1
      %p194 = por %p192, %p193
      %p195 = scmp.ne.s32.totalorder %s186, %s187
      %p196 = scmp.eq.s32.totalorder %s29, 0
      %p197 = por %p195, %p196
      %p198 = scmp.ne.s32.totalorder %s186, %s187
      %p199 = scmp.eq.s32.totalorder %s30, 1
      %p200 = por %p198, %p199
      %p202 = scmp.ne.s32.totalorder %s187, %s201
      %p203 = scmp.eq.s32.totalorder %s30, 0
      %p204 = por %p202, %p203
      %s205 = ssub.s32 %s24, %s31
      %p206 = scmp.eq.s32.totalorder %s205, 0
      %s208 = sadd.s32 %s207, 1
      %s209 = scalar_select %p206, %s207, %s208
      %p212 = pneg %p206
      %p213 = scmp.eq.s32.totalorder %s24, 1
      %p214 = por %p212, %p213
      %p215 = scmp.ne.s32.totalorder %s207, %s210
      %p216 = scmp.eq.s32.totalorder %s24, 0
      %p217 = por %p215, %p216
      %p218 = scmp.ne.s32.totalorder %s207, %s210
      %p219 = scmp.eq.s32.totalorder %s29, 1
      %p220 = por %p218, %p219
      %p221 = scmp.ne.s32.totalorder %s210, %s211
      %p222 = scmp.eq.s32.totalorder %s29, 0
      %p223 = por %p221, %p222
      %p224 = scmp.ne.s32.totalorder %s210, %s211
      %p225 = scmp.eq.s32.totalorder %s30, 1
      %p226 = por %p224, %p225
      %p228 = scmp.ne.s32.totalorder %s211, %s227
      %p229 = scmp.eq.s32.totalorder %s30, 0
      %p230 = por %p228, %p229
      %p231 = scmp.le.s32.totalorder 1, %s24
      %p232 = scmp.lt.s32.totalorder %s24, 3
      %p233 = pnand %p231, %p232
      %p234 = pneg %p233
      // Predicated region
      $region9: #{tpu_custom_call.1} parent=5 // pred_check
        _
      $region10: #{tpu_custom_call.1} parent=5 // pred_check_branch
        %236 = sbr.rel (%p233) target = $region12
      $region11: #{tpu_custom_call.1} parent=5 // pred_region
        %s237 = ssub.s32 %s24, 1
        // Predicated region
        $region13: #{tpu_custom_call.1} parent=11 // pred_check
          %p238 = pneg %p71
        $region14: #{tpu_custom_call.1} parent=11 // pred_check_branch
          %240 = sbr.rel (%p238) target = $region16
        $region15: #{tpu_custom_call.1} parent=11 // pred_region
          %242 = vsyncadd [#allocation7], 0
          %s243 = sshll.u32 %s1, 4
          %s244 = int_to_ptr.hbm [resolvable:$true] %s243
          %s245 = sshll.u32 [#allocation6], 4
          %s246 = int_to_ptr.vmem [resolvable:$true] %s245
          %251 = dma.hbm_to_vmem [thread:$0]  %s244, 4096, %s246, [#allocation7], 512, 512, 32
        $region16: #{tpu_custom_call.1} parent=11 // pred_fallthru
          _
        // Predicated region
        $region17: #{tpu_custom_call.1} parent=11 // pred_check
          %p252 = pneg %p92
        $region18: #{tpu_custom_call.1} parent=11 // pred_check_branch
          %254 = sbr.rel (%p252) target = $region20
        $region19: #{tpu_custom_call.1} parent=11 // pred_region
          %256 = vsyncadd [#allocation7], 0
          %s257 = sshll.u32 %s2, 4
          %s258 = int_to_ptr.hbm [resolvable:$true] %s257
          %s259 = sshll.u32 [#allocation8], 4
          %s260 = int_to_ptr.vmem [resolvable:$true] %s259
          %265 = dma.hbm_to_vmem [thread:$0]  %s258, 4096, %s260, [#allocation7], 512, 512, 32
        $region20: #{tpu_custom_call.1} parent=11 // pred_fallthru
          _
        // Predicated region
        $region21: #{tpu_custom_call.1} parent=11 // pred_check
          %p266 = pneg %p113
        $region22: #{tpu_custom_call.1} parent=11 // pred_check_branch
          %268 = sbr.rel (%p266) target = $region24
        $region23: #{tpu_custom_call.1} parent=11 // pred_region
          _
        $region24: #{tpu_custom_call.1} parent=11 // pred_fallthru
          _
        // Predicated region
        $region25: #{tpu_custom_call.1} parent=11 // pred_check
          %p269 = pneg %p134
        $region26: #{tpu_custom_call.1} parent=11 // pred_check_branch
          %271 = sbr.rel (%p269) target = $region28
        $region27: #{tpu_custom_call.1} parent=11 // pred_region
          %273 = vsyncadd [#allocation10], 0
          %s274 = sshll.u32 %s4, 4
          %s275 = int_to_ptr.hbm [resolvable:$true] %s274
          %s276 = sshll.u32 [#allocation9], 4
          %s277 = int_to_ptr.vmem [resolvable:$true] %s276
          %282 = dma.hbm_to_vmem [thread:$0]  %s275, 32768, %s277, [#allocation10], 512, 512, 32
        $region28: #{tpu_custom_call.1} parent=11 // pred_fallthru
          _
        // Predicated region
        $region29: #{tpu_custom_call.1} parent=11 // pred_check
          %p283 = pneg %p155
        $region30: #{tpu_custom_call.1} parent=11 // pred_check_branch
          %285 = sbr.rel (%p283) target = $region32
        $region31: #{tpu_custom_call.1} parent=11 // pred_region
          %287 = vsyncadd [#allocation10], 0
          %s289 = sshll.u32 %s5, 4
          %s290 = int_to_ptr.hbm [resolvable:$true] %s289
          %s291 = sshll.u32 [#allocation11], 4
          %s292 = int_to_ptr.vmem [resolvable:$true] %s291
          %294 = dma.hbm_to_vmem [thread:$0]  %s290, 64, %s292, [#allocation10]
        $region32: #{tpu_custom_call.1} parent=11 // pred_fallthru
          _
        // Predicated region
        $region33: #{tpu_custom_call.1} parent=11 // pred_check
          %p295 = pneg %p176
        $region34: #{tpu_custom_call.1} parent=11 // pred_check_branch
          %297 = sbr.rel (%p295) target = $region36
        $region35: #{tpu_custom_call.1} parent=11 // pred_region
          _
        $region36: #{tpu_custom_call.1} parent=11 // pred_fallthru
          _
        // Predicated region
        $region37: #{tpu_custom_call.1} parent=11 // pred_check
          %p298 = pneg %p197
        $region38: #{tpu_custom_call.1} parent=11 // pred_check_branch
          %300 = sbr.rel (%p298) target = $region40
        $region39: #{tpu_custom_call.1} parent=11 // pred_region
          _
        $region40: #{tpu_custom_call.1} parent=11 // pred_fallthru
          _
      $region12: #{tpu_custom_call.1} parent=5 // pred_fallthru
        _
      %p301 = scmp.lt.s32.totalorder %s24, 2
      // Predicated region
      $region41: #{tpu_custom_call.1} parent=5 // pred_check
        %p302 = pneg %p301
      $region42: #{tpu_custom_call.1} parent=5 // pred_check_branch
        %304 = sbr.rel (%p302) target = $region44
      $region43: #{tpu_custom_call.1} parent=5 // pred_region
        // Predicated region
        $region45: #{tpu_custom_call.1} parent=43 // pred_check
          %p305 = pneg %p44
        $region46: #{tpu_custom_call.1} parent=43 // pred_check_branch
          %307 = sbr.rel (%p305) target = $region48
        $region47: #{tpu_custom_call.1} parent=43 // pred_region
          %s308 = sand.u32 %s34, 1
          %s309 = scalar_lea.sflag [#allocation4], %s308
          %s310 = sand.u32 %s34, 1
          %s311 = smul.addr %s310, 8
          %s312 = scalar_lea.vmem [#allocation3], %s311
          %314 = vsyncadd %s309, 0
          %s315 = smul.addr %s24, 8
          %s316 = scalar_lea.hbm %s0, %s315
          %s318 = sshll.u32 %s316, 4
          %s319 = int_to_ptr.hbm [resolvable:$true] %s318
          %s320 = sshll.u32 %s312, 4
          %s321 = int_to_ptr.vmem [resolvable:$true] %s320
          %323 = dma.hbm_to_vmem [thread:$0]  %s319, 128, %s321, %s309
        $region48: #{tpu_custom_call.1} parent=43 // pred_fallthru
          _
      $region44: #{tpu_custom_call.1} parent=5 // pred_fallthru
        _
      %p324 = scmp.le.s32.totalorder 1, %s24
      %p325 = scmp.lt.s32.totalorder %s24, 3
      %p326 = pnand %p324, %p325
      %p327 = pneg %p326
      // Predicated region
      $region49: #{tpu_custom_call.1} parent=5 // pred_check
        _
      $region50: #{tpu_custom_call.1} parent=5 // pred_check_branch
        %329 = sbr.rel (%p326) target = $region52
      $region51: #{tpu_custom_call.1} parent=5 // pred_region
        %s330 = ssub.s32 %s24, 1
        %s331 = sand.u32 %s37, 1
        %s332 = scalar_lea.sflag [#allocation4], %s331
        %s333 = sand.u32 %s37, 1
        %s334 = smul.addr %s333, 8
        %s335 = scalar_lea.vmem [#allocation3], %s334
        // Predicated region
        $region53: #{tpu_custom_call.1} parent=51 // pred_check
          %p336 = pneg %p50
        $region54: #{tpu_custom_call.1} parent=51 // pred_check_branch
          %338 = sbr.rel (%p336) target = $region56
        $region55: #{tpu_custom_call.1} parent=51 // pred_region
          %340 = dma.done %s332, 128
        $region56: #{tpu_custom_call.1} parent=51 // pred_fallthru
          _
        // Predicated region
        $region57: #{tpu_custom_call.1} parent=51 // pred_check
          %p341 = pneg %p71
        $region58: #{tpu_custom_call.1} parent=51 // pred_check_branch
          %343 = sbr.rel (%p341) target = $region60
        $region59: #{tpu_custom_call.1} parent=51 // pred_region
          %345 = dma.done [#allocation7], 4096
        $region60: #{tpu_custom_call.1} parent=51 // pred_fallthru
          _
        // Predicated region
        $region61: #{tpu_custom_call.1} parent=51 // pred_check
          %p346 = pneg %p92
        $region62: #{tpu_custom_call.1} parent=51 // pred_check_branch
          %348 = sbr.rel (%p346) target = $region64
        $region63: #{tpu_custom_call.1} parent=51 // pred_region
          %350 = dma.done [#allocation7], 4096
        $region64: #{tpu_custom_call.1} parent=51 // pred_fallthru
          _
        // Predicated region
        $region65: #{tpu_custom_call.1} parent=51 // pred_check
          %p351 = pneg %p134
        $region66: #{tpu_custom_call.1} parent=51 // pred_check_branch
          %353 = sbr.rel (%p351) target = $region68
        $region67: #{tpu_custom_call.1} parent=51 // pred_region
          %355 = dma.done [#allocation10], 32768
        $region68: #{tpu_custom_call.1} parent=51 // pred_fallthru
          _
        // Predicated region
        $region69: #{tpu_custom_call.1} parent=51 // pred_check
          %p356 = pneg %p155
        $region70: #{tpu_custom_call.1} parent=51 // pred_check_branch
          %358 = sbr.rel (%p356) target = $region72
        $region71: #{tpu_custom_call.1} parent=51 // pred_region
          %360 = dma.done [#allocation10], 64
        $region72: #{tpu_custom_call.1} parent=51 // pred_fallthru
          _
        %s361 = sand.u32 %s37, 1
        %s362 = scalar_lea.sflag [#allocation4], %s361
        %s363 = sand.u32 %s37, 1
        %s364 = smul.addr %s363, 8
        %s365 = scalar_lea.vmem [#allocation3], %s364
        %p366 = pneg %p50
        %p367 = pneg %p47
        %p368 = pneg %p71
        %p369 = pneg %p68
        %p370 = pneg %p92
        %p371 = pneg %p89
        %p372 = pneg %p113
        %p373 = pneg %p110
        %p374 = pneg %p134
        %p375 = pneg %p131
        %p376 = pneg %p155
        %p377 = pneg %p152
        %p378 = pneg %p176
        %p379 = pneg %p173
        %p380 = pneg %p197
        %p381 = pneg %p194
        %p382 = pneg %p223
        %p383 = pneg %p220
        %s384 = sand.u32 %s210, 1
        %s385 = scalar_lea.sflag [#allocation5], %s384
        %s386 = sand.u32 %s210, 1
        %s387 = scalar_lea.vmem [#allocation12], %s386
        %v388 = vld [vmem:[%s335] sm:$0xff]
        %v389 = vld [vmem:[#allocation6] sm:$0xff]
        %v390 = vld [vmem:[#allocation6 + $0x8] sm:$0xff]
        %v391 = vld [vmem:[#allocation6 + $0x10] sm:$0xff]
        %v392 = vld [vmem:[#allocation6 + $0x18] sm:$0xff]
        %v393 = vld [vmem:[#allocation6 + $0x20] sm:$0xff]
        %v394 = vld [vmem:[#allocation6 + $0x28] sm:$0xff]
        %v395 = vld [vmem:[#allocation6 + $0x30] sm:$0xff]
        %v396 = vld [vmem:[#allocation6 + $0x38] sm:$0xff]
        %v397 = vld [vmem:[#allocation6 + $0x40] sm:$0xff]
        %v398 = vld [vmem:[#allocation6 + $0x48] sm:$0xff]
        %v399 = vld [vmem:[#allocation6 + $0x50] sm:$0xff]
        %v400 = vld [vmem:[#allocation6 + $0x58] sm:$0xff]
        %v401 = vld [vmem:[#allocation6 + $0x60] sm:$0xff]
        %v402 = vld [vmem:[#allocation6 + $0x68] sm:$0xff]
        %v403 = vld [vmem:[#allocation6 + $0x70] sm:$0xff]
        %v404 = vld [vmem:[#allocation6 + $0x78] sm:$0xff]
        %v405 = vld [vmem:[#allocation6 + $0x80] sm:$0xff]
        %v406 = vld [vmem:[#allocation6 + $0x88] sm:$0xff]
        %v407 = vld [vmem:[#allocation6 + $0x90] sm:$0xff]
        %v408 = vld [vmem:[#allocation6 + $0x98] sm:$0xff]
        %v409 = vld [vmem:[#allocation6 + $0xa0] sm:$0xff]
        %v410 = vld [vmem:[#allocation6 + $0xa8] sm:$0xff]
        %v411 = vld [vmem:[#allocation6 + $0xb0] sm:$0xff]
        %v412 = vld [vmem:[#allocation6 + $0xb8] sm:$0xff]
        %v413 = vld [vmem:[#allocation6 + $0xc0] sm:$0xff]
        %v414 = vld [vmem:[#allocation6 + $0xc8] sm:$0xff]
        %v415 = vld [vmem:[#allocation6 + $0xd0] sm:$0xff]
        %v416 = vld [vmem:[#allocation6 + $0xd8] sm:$0xff]
        %v417 = vld [vmem:[#allocation6 + $0xe0] sm:$0xff]
        %v418 = vld [vmem:[#allocation6 + $0xe8] sm:$0xff]
        %v419 = vld [vmem:[#allocation6 + $0xf0] sm:$0xff]
        %v420 = vld [vmem:[#allocation6 + $0xf8] sm:$0xff]
        %vm421 = vcmask 523264
        %v423 = vsel %vm421, %v388, 0
        %425 = vmatpush.msra.mxu0 0.0
        %426 = vmatpush.msra.mxu0 0.0
        %427 = vmatpush.msra.mxu0 0.0
        %428 = vmatpush.msra.mxu0 0.0
        %429 = vmatpush.msra.mxu0 0.0
        %430 = vmatpush.msra.mxu0 0.0
        %431 = vmatpush.msra.mxu0 0.0
        %432 = vmatpush.msra.mxu0 0.0
        %433 = vmatpush.msra.mxu0 %v417
        %434 = vmatpush.msra.mxu0 %v413
        %435 = vmatpush.msra.mxu0 %v409
        %436 = vmatpush.msra.mxu0 %v405
        %437 = vmatpush.msra.mxu0 %v401
        %438 = vmatpush.msra.mxu0 %v397
        %439 = vmatpush.msra.mxu0 %v393
        %440 = vmatpush.msra.mxu0 %v389
        %441 = vmatmul.f32.gmra.mxu0 %v423
        %v442 = vpop.f32.mrf.mxu0
        %v443 = vadd.f32 0.0, %v442
        %444 = vdwg.mxu0
        %445 = vmatpush.msra.mxu0 0.0
        %446 = vmatpush.msra.mxu0 0.0
        %447 = vmatpush.msra.mxu0 0.0
        %448 = vmatpush.msra.mxu0 0.0
        %449 = vmatpush.msra.mxu0 0.0
        %450 = vmatpush.msra.mxu0 0.0
        %451 = vmatpush.msra.mxu0 0.0
        %452 = vmatpush.msra.mxu0 0.0
        %453 = vmatpush.msra.mxu0 %v418
        %454 = vmatpush.msra.mxu0 %v414
        %455 = vmatpush.msra.mxu0 %v410
        %456 = vmatpush.msra.mxu0 %v406
        %457 = vmatpush.msra.mxu0 %v402
        %458 = vmatpush.msra.mxu0 %v398
        %459 = vmatpush.msra.mxu0 %v394
        %460 = vmatpush.msra.mxu0 %v390
        %461 = vmatmul.f32.gmra.mxu0 %v423
        %v462 = vpop.f32.mrf.mxu0
        %v463 = vadd.f32 0.0, %v462
        %464 = vdwg.mxu0
        %465 = vmatpush.msra.mxu0 0.0
        %466 = vmatpush.msra.mxu0 0.0
        %467 = vmatpush.msra.mxu0 0.0
        %468 = vmatpush.msra.mxu0 0.0
        %469 = vmatpush.msra.mxu0 0.0
        %470 = vmatpush.msra.mxu0 0.0
        %471 = vmatpush.msra.mxu0 0.0
        %472 = vmatpush.msra.mxu0 0.0
        %473 = vmatpush.msra.mxu0 %v419
        %474 = vmatpush.msra.mxu0 %v415
        %475 = vmatpush.msra.mxu0 %v411
        %476 = vmatpush.msra.mxu0 %v407
        %477 = vmatpush.msra.mxu0 %v403
        %478 = vmatpush.msra.mxu0 %v399
        %479 = vmatpush.msra.mxu0 %v395
        %480 = vmatpush.msra.mxu0 %v391
        %481 = vmatmul.f32.gmra.mxu0 %v423
        %v482 = vpop.f32.mrf.mxu0
        %v483 = vadd.f32 0.0, %v482
        %484 = vdwg.mxu0
        %485 = vmatpush.msra.mxu0 0.0
        %486 = vmatpush.msra.mxu0 0.0
        %487 = vmatpush.msra.mxu0 0.0
        %488 = vmatpush.msra.mxu0 0.0
        %489 = vmatpush.msra.mxu0 0.0
        %490 = vmatpush.msra.mxu0 0.0
        %491 = vmatpush.msra.mxu0 0.0
        %492 = vmatpush.msra.mxu0 0.0
        %493 = vmatpush.msra.mxu0 %v420
        %494 = vmatpush.msra.mxu0 %v416
        %495 = vmatpush.msra.mxu0 %v412
        %496 = vmatpush.msra.mxu0 %v408
        %497 = vmatpush.msra.mxu0 %v404
        %498 = vmatpush.msra.mxu0 %v400
        %499 = vmatpush.msra.mxu0 %v396
        %500 = vmatpush.msra.mxu0 %v392
        %501 = vmatmul.f32.gmra.mxu0 %v423
        %v502 = vpop.f32.mrf.mxu0
        %v503 = vadd.f32 0.0, %v502
        %504 = vdwg.mxu0
        %v505 = vld [vmem:[#allocation8] sm:$0xff]
        %v506 = vld [vmem:[#allocation8 + $0x8] sm:$0xff]
        %v507 = vld [vmem:[#allocation8 + $0x10] sm:$0xff]
        %v508 = vld [vmem:[#allocation8 + $0x18] sm:$0xff]
        %v509 = vld [vmem:[#allocation8 + $0x20] sm:$0xff]
        %v510 = vld [vmem:[#allocation8 + $0x28] sm:$0xff]
        %v511 = vld [vmem:[#allocation8 + $0x30] sm:$0xff]
        %v512 = vld [vmem:[#allocation8 + $0x38] sm:$0xff]
        %v513 = vld [vmem:[#allocation8 + $0x40] sm:$0xff]
        %v514 = vld [vmem:[#allocation8 + $0x48] sm:$0xff]
        %v515 = vld [vmem:[#allocation8 + $0x50] sm:$0xff]
        %v516 = vld [vmem:[#allocation8 + $0x58] sm:$0xff]
        %v517 = vld [vmem:[#allocation8 + $0x60] sm:$0xff]
        %v518 = vld [vmem:[#allocation8 + $0x68] sm:$0xff]
        %v519 = vld [vmem:[#allocation8 + $0x70] sm:$0xff]
        %v520 = vld [vmem:[#allocation8 + $0x78] sm:$0xff]
        %v521 = vld [vmem:[#allocation8 + $0x80] sm:$0xff]
        %v522 = vld [vmem:[#allocation8 + $0x88] sm:$0xff]
        %v523 = vld [vmem:[#allocation8 + $0x90] sm:$0xff]
        %v524 = vld [vmem:[#allocation8 + $0x98] sm:$0xff]
        %v525 = vld [vmem:[#allocation8 + $0xa0] sm:$0xff]
        %v526 = vld [vmem:[#allocation8 + $0xa8] sm:$0xff]
        %v527 = vld [vmem:[#allocation8 + $0xb0] sm:$0xff]
        %v528 = vld [vmem:[#allocation8 + $0xb8] sm:$0xff]
        %v529 = vld [vmem:[#allocation8 + $0xc0] sm:$0xff]
        %v530 = vld [vmem:[#allocation8 + $0xc8] sm:$0xff]
        %v531 = vld [vmem:[#allocation8 + $0xd0] sm:$0xff]
        %v532 = vld [vmem:[#allocation8 + $0xd8] sm:$0xff]
        %v533 = vld [vmem:[#allocation8 + $0xe0] sm:$0xff]
        %v534 = vld [vmem:[#allocation8 + $0xe8] sm:$0xff]
        %v535 = vld [vmem:[#allocation8 + $0xf0] sm:$0xff]
        %v536 = vld [vmem:[#allocation8 + $0xf8] sm:$0xff]
        %537 = vmatpush.msra.mxu0 0.0
        %538 = vmatpush.msra.mxu0 0.0
        %539 = vmatpush.msra.mxu0 0.0
        %540 = vmatpush.msra.mxu0 0.0
        %541 = vmatpush.msra.mxu0 0.0
        %542 = vmatpush.msra.mxu0 0.0
        %543 = vmatpush.msra.mxu0 0.0
        %544 = vmatpush.msra.mxu0 0.0
        %545 = vmatpush.msra.mxu0 %v533
        %546 = vmatpush.msra.mxu0 %v529
        %547 = vmatpush.msra.mxu0 %v525
        %548 = vmatpush.msra.mxu0 %v521
        %549 = vmatpush.msra.mxu0 %v517
        %550 = vmatpush.msra.mxu0 %v513
        %551 = vmatpush.msra.mxu0 %v509
        %552 = vmatpush.msra.mxu0 %v505
        %553 = vmatmul.f32.gmra.mxu0 %v423
        %v554 = vpop.f32.mrf.mxu0
        %v555 = vadd.f32 0.0, %v554
        %556 = vdwg.mxu0
        %557 = vmatpush.msra.mxu0 0.0
        %558 = vmatpush.msra.mxu0 0.0
        %559 = vmatpush.msra.mxu0 0.0
        %560 = vmatpush.msra.mxu0 0.0
        %561 = vmatpush.msra.mxu0 0.0
        %562 = vmatpush.msra.mxu0 0.0
        %563 = vmatpush.msra.mxu0 0.0
        %564 = vmatpush.msra.mxu0 0.0
        %565 = vmatpush.msra.mxu0 %v534
        %566 = vmatpush.msra.mxu0 %v530
        %567 = vmatpush.msra.mxu0 %v526
        %568 = vmatpush.msra.mxu0 %v522
        %569 = vmatpush.msra.mxu0 %v518
        %570 = vmatpush.msra.mxu0 %v514
        %571 = vmatpush.msra.mxu0 %v510
        %572 = vmatpush.msra.mxu0 %v506
        %573 = vmatmul.f32.gmra.mxu0 %v423
        %v574 = vpop.f32.mrf.mxu0
        %v575 = vadd.f32 0.0, %v574
        %576 = vdwg.mxu0
        %577 = vmatpush.msra.mxu0 0.0
        %578 = vmatpush.msra.mxu0 0.0
        %579 = vmatpush.msra.mxu0 0.0
        %580 = vmatpush.msra.mxu0 0.0
        %581 = vmatpush.msra.mxu0 0.0
        %582 = vmatpush.msra.mxu0 0.0
        %583 = vmatpush.msra.mxu0 0.0
        %584 = vmatpush.msra.mxu0 0.0
        %585 = vmatpush.msra.mxu0 %v535
        %586 = vmatpush.msra.mxu0 %v531
        %587 = vmatpush.msra.mxu0 %v527
        %588 = vmatpush.msra.mxu0 %v523
        %589 = vmatpush.msra.mxu0 %v519
        %590 = vmatpush.msra.mxu0 %v515
        %591 = vmatpush.msra.mxu0 %v511
        %592 = vmatpush.msra.mxu0 %v507
        %593 = vmatmul.f32.gmra.mxu0 %v423
        %v594 = vpop.f32.mrf.mxu0
        %v595 = vadd.f32 0.0, %v594
        %596 = vdwg.mxu0
        %597 = vmatpush.msra.mxu0 0.0
        %598 = vmatpush.msra.mxu0 0.0
        %599 = vmatpush.msra.mxu0 0.0
        %600 = vmatpush.msra.mxu0 0.0
        %601 = vmatpush.msra.mxu0 0.0
        %602 = vmatpush.msra.mxu0 0.0
        %603 = vmatpush.msra.mxu0 0.0
        %604 = vmatpush.msra.mxu0 0.0
        %605 = vmatpush.msra.mxu0 %v536
        %606 = vmatpush.msra.mxu0 %v532
        %607 = vmatpush.msra.mxu0 %v528
        %608 = vmatpush.msra.mxu0 %v524
        %609 = vmatpush.msra.mxu0 %v520
        %610 = vmatpush.msra.mxu0 %v516
        %611 = vmatpush.msra.mxu0 %v512
        %612 = vmatpush.msra.mxu0 %v508
        %613 = vmatmul.f32.gmra.mxu0 %v423
        %v614 = vpop.f32.mrf.mxu0
        %v615 = vadd.f32 0.0, %v614
        %616 = vdwg.mxu0
        %v617 = vmax.f32 %v443, %v555
        %v618 = vmax.f32 %v463, %v575
        %v619 = vmax.f32 %v483, %v595
        %v620 = vmax.f32 %v503, %v615
        %v621 = vld [vmem:[%s3] sm:$0xf]
        %v623 = vperm.slane %v621, 0
        %v624 = vperm.slane %v621, 1
        %v625 = vperm.slane %v621, 2
        %v626 = vperm.slane %v621, 3
        %v631 = vadd.f32 %v617, %v623
        %v632 = vadd.f32 %v618, %v624
        %v633 = vadd.f32 %v619, %v625
        %v634 = vadd.f32 %v620, %v626
        %v635 = vmax.f32 %v631, 0.0
        %v636 = vmax.f32 %v632, 0.0
        %v637 = vmax.f32 %v633, 0.0
        %v638 = vmax.f32 %v634, 0.0
        %v639 = vld [vmem:[#allocation9] sm:$0xff]
        %v640 = vld [vmem:[#allocation9 + $0x8] sm:$0xff]
        %v641 = vld [vmem:[#allocation9 + $0x10] sm:$0xff]
        %v642 = vld [vmem:[#allocation9 + $0x18] sm:$0xff]
        %v643 = vld [vmem:[#allocation9 + $0x20] sm:$0xff]
        %v644 = vld [vmem:[#allocation9 + $0x28] sm:$0xff]
        %v645 = vld [vmem:[#allocation9 + $0x30] sm:$0xff]
        %v646 = vld [vmem:[#allocation9 + $0x38] sm:$0xff]
        %v647 = vld [vmem:[#allocation9 + $0x40] sm:$0xff]
        %v648 = vld [vmem:[#allocation9 + $0x48] sm:$0xff]
        %v649 = vld [vmem:[#allocation9 + $0x50] sm:$0xff]
        %v650 = vld [vmem:[#allocation9 + $0x58] sm:$0xff]
        %v651 = vld [vmem:[#allocation9 + $0x60] sm:$0xff]
        %v652 = vld [vmem:[#allocation9 + $0x68] sm:$0xff]
        %v653 = vld [vmem:[#allocation9 + $0x70] sm:$0xff]
        %v654 = vld [vmem:[#allocation9 + $0x78] sm:$0xff]
        %v655 = vld [vmem:[#allocation9 + $0x80] sm:$0xff]
        %v656 = vld [vmem:[#allocation9 + $0x88] sm:$0xff]
        %v657 = vld [vmem:[#allocation9 + $0x90] sm:$0xff]
        %v658 = vld [vmem:[#allocation9 + $0x98] sm:$0xff]
        %v659 = vld [vmem:[#allocation9 + $0xa0] sm:$0xff]
        %v660 = vld [vmem:[#allocation9 + $0xa8] sm:$0xff]
        %v661 = vld [vmem:[#allocation9 + $0xb0] sm:$0xff]
        %v662 = vld [vmem:[#allocation9 + $0xb8] sm:$0xff]
        %v663 = vld [vmem:[#allocation9 + $0xc0] sm:$0xff]
        %v664 = vld [vmem:[#allocation9 + $0xc8] sm:$0xff]
        %v665 = vld [vmem:[#allocation9 + $0xd0] sm:$0xff]
        %v666 = vld [vmem:[#allocation9 + $0xd8] sm:$0xff]
        %v667 = vld [vmem:[#allocation9 + $0xe0] sm:$0xff]
        %v668 = vld [vmem:[#allocation9 + $0xe8] sm:$0xff]
        %v669 = vld [vmem:[#allocation9 + $0xf0] sm:$0xff]
        %v670 = vld [vmem:[#allocation9 + $0xf8] sm:$0xff]
        %v671 = vld [vmem:[#allocation9 + $0x100] sm:$0xff]
        %v672 = vld [vmem:[#allocation9 + $0x108] sm:$0xff]
        %v673 = vld [vmem:[#allocation9 + $0x110] sm:$0xff]
        %v674 = vld [vmem:[#allocation9 + $0x118] sm:$0xff]
        %v675 = vld [vmem:[#allocation9 + $0x120] sm:$0xff]
        %v676 = vld [vmem:[#allocation9 + $0x128] sm:$0xff]
        %v677 = vld [vmem:[#allocation9 + $0x130] sm:$0xff]
        %v678 = vld [vmem:[#allocation9 + $0x138] sm:$0xff]
        %v679 = vld [vmem:[#allocation9 + $0x140] sm:$0xff]
        %v680 = vld [vmem:[#allocation9 + $0x148] sm:$0xff]
        %v681 = vld [vmem:[#allocation9 + $0x150] sm:$0xff]
        %v682 = vld [vmem:[#allocation9 + $0x158] sm:$0xff]
        %v683 = vld [vmem:[#allocation9 + $0x160] sm:$0xff]
        %v684 = vld [vmem:[#allocation9 + $0x168] sm:$0xff]
        %v685 = vld [vmem:[#allocation9 + $0x170] sm:$0xff]
        %v686 = vld [vmem:[#allocation9 + $0x178] sm:$0xff]
        %v687 = vld [vmem:[#allocation9 + $0x180] sm:$0xff]
        %v688 = vld [vmem:[#allocation9 + $0x188] sm:$0xff]
        %v689 = vld [vmem:[#allocation9 + $0x190] sm:$0xff]
        %v690 = vld [vmem:[#allocation9 + $0x198] sm:$0xff]
        %v691 = vld [vmem:[#allocation9 + $0x1a0] sm:$0xff]
        %v692 = vld [vmem:[#allocation9 + $0x1a8] sm:$0xff]
        %v693 = vld [vmem:[#allocation9 + $0x1b0] sm:$0xff]
        %v694 = vld [vmem:[#allocation9 + $0x1b8] sm:$0xff]
        %v695 = vld [vmem:[#allocation9 + $0x1c0] sm:$0xff]
        %v696 = vld [vmem:[#allocation9 + $0x1c8] sm:$0xff]
        %v697 = vld [vmem:[#allocation9 + $0x1d0] sm:$0xff]
        %v698 = vld [vmem:[#allocation9 + $0x1d8] sm:$0xff]
        %v699 = vld [vmem:[#allocation9 + $0x1e0] sm:$0xff]
        %v700 = vld [vmem:[#allocation9 + $0x1e8] sm:$0xff]
        %v701 = vld [vmem:[#allocation9 + $0x1f0] sm:$0xff]
        %v702 = vld [vmem:[#allocation9 + $0x1f8] sm:$0xff]
        %v703 = vld [vmem:[#allocation9 + $0x200] sm:$0xff]
        %v704 = vld [vmem:[#allocation9 + $0x208] sm:$0xff]
        %v705 = vld [vmem:[#allocation9 + $0x210] sm:$0xff]
        %v706 = vld [vmem:[#allocation9 + $0x218] sm:$0xff]
        %v707 = vld [vmem:[#allocation9 + $0x220] sm:$0xff]
        %v708 = vld [vmem:[#allocation9 + $0x228] sm:$0xff]
        %v709 = vld [vmem:[#allocation9 + $0x230] sm:$0xff]
        %v710 = vld [vmem:[#allocation9 + $0x238] sm:$0xff]
        %v711 = vld [vmem:[#allocation9 + $0x240] sm:$0xff]
        %v712 = vld [vmem:[#allocation9 + $0x248] sm:$0xff]
        %v713 = vld [vmem:[#allocation9 + $0x250] sm:$0xff]
        %v714 = vld [vmem:[#allocation9 + $0x258] sm:$0xff]
        %v715 = vld [vmem:[#allocation9 + $0x260] sm:$0xff]
        %v716 = vld [vmem:[#allocation9 + $0x268] sm:$0xff]
        %v717 = vld [vmem:[#allocation9 + $0x270] sm:$0xff]
        %v718 = vld [vmem:[#allocation9 + $0x278] sm:$0xff]
        %v719 = vld [vmem:[#allocation9 + $0x280] sm:$0xff]
        %v720 = vld [vmem:[#allocation9 + $0x288] sm:$0xff]
        %v721 = vld [vmem:[#allocation9 + $0x290] sm:$0xff]
        %v722 = vld [vmem:[#allocation9 + $0x298] sm:$0xff]
        %v723 = vld [vmem:[#allocation9 + $0x2a0] sm:$0xff]
        %v724 = vld [vmem:[#allocation9 + $0x2a8] sm:$0xff]
        %v725 = vld [vmem:[#allocation9 + $0x2b0] sm:$0xff]
        %v726 = vld [vmem:[#allocation9 + $0x2b8] sm:$0xff]
        %v727 = vld [vmem:[#allocation9 + $0x2c0] sm:$0xff]
        %v728 = vld [vmem:[#allocation9 + $0x2c8] sm:$0xff]
        %v729 = vld [vmem:[#allocation9 + $0x2d0] sm:$0xff]
        %v730 = vld [vmem:[#allocation9 + $0x2d8] sm:$0xff]
        %v731 = vld [vmem:[#allocation9 + $0x2e0] sm:$0xff]
        %v732 = vld [vmem:[#allocation9 + $0x2e8] sm:$0xff]
        %v733 = vld [vmem:[#allocation9 + $0x2f0] sm:$0xff]
        %v734 = vld [vmem:[#allocation9 + $0x2f8] sm:$0xff]
        %v735 = vld [vmem:[#allocation9 + $0x300] sm:$0xff]
        %v736 = vld [vmem:[#allocation9 + $0x308] sm:$0xff]
        %v737 = vld [vmem:[#allocation9 + $0x310] sm:$0xff]
        %v738 = vld [vmem:[#allocation9 + $0x318] sm:$0xff]
        %v739 = vld [vmem:[#allocation9 + $0x320] sm:$0xff]
        %v740 = vld [vmem:[#allocation9 + $0x328] sm:$0xff]
        %v741 = vld [vmem:[#allocation9 + $0x330] sm:$0xff]
        %v742 = vld [vmem:[#allocation9 + $0x338] sm:$0xff]
        %v743 = vld [vmem:[#allocation9 + $0x340] sm:$0xff]
        %v744 = vld [vmem:[#allocation9 + $0x348] sm:$0xff]
        %v745 = vld [vmem:[#allocation9 + $0x350] sm:$0xff]
        %v746 = vld [vmem:[#allocation9 + $0x358] sm:$0xff]
        %v747 = vld [vmem:[#allocation9 + $0x360] sm:$0xff]
        %v748 = vld [vmem:[#allocation9 + $0x368] sm:$0xff]
        %v749 = vld [vmem:[#allocation9 + $0x370] sm:$0xff]
        %v750 = vld [vmem:[#allocation9 + $0x378] sm:$0xff]
        %v751 = vld [vmem:[#allocation9 + $0x380] sm:$0xff]
        %v752 = vld [vmem:[#allocation9 + $0x388] sm:$0xff]
        %v753 = vld [vmem:[#allocation9 + $0x390] sm:$0xff]
        %v754 = vld [vmem:[#allocation9 + $0x398] sm:$0xff]
        %v755 = vld [vmem:[#allocation9 + $0x3a0] sm:$0xff]
        %v756 = vld [vmem:[#allocation9 + $0x3a8] sm:$0xff]
        %v757 = vld [vmem:[#allocation9 + $0x3b0] sm:$0xff]
        %v758 = vld [vmem:[#allocation9 + $0x3b8] sm:$0xff]
        %v759 = vld [vmem:[#allocation9 + $0x3c0] sm:$0xff]
        %v760 = vld [vmem:[#allocation9 + $0x3c8] sm:$0xff]
        %v761 = vld [vmem:[#allocation9 + $0x3d0] sm:$0xff]
        %v762 = vld [vmem:[#allocation9 + $0x3d8] sm:$0xff]
        %v763 = vld [vmem:[#allocation9 + $0x3e0] sm:$0xff]
        %v764 = vld [vmem:[#allocation9 + $0x3e8] sm:$0xff]
        %v765 = vld [vmem:[#allocation9 + $0x3f0] sm:$0xff]
        %v766 = vld [vmem:[#allocation9 + $0x3f8] sm:$0xff]
        %v767 = vld [vmem:[#allocation9 + $0x400] sm:$0xff]
        %v768 = vld [vmem:[#allocation9 + $0x408] sm:$0xff]
        %v769 = vld [vmem:[#allocation9 + $0x410] sm:$0xff]
        %v770 = vld [vmem:[#allocation9 + $0x418] sm:$0xff]
        %v771 = vld [vmem:[#allocation9 + $0x420] sm:$0xff]
        %v772 = vld [vmem:[#allocation9 + $0x428] sm:$0xff]
        %v773 = vld [vmem:[#allocation9 + $0x430] sm:$0xff]
        %v774 = vld [vmem:[#allocation9 + $0x438] sm:$0xff]
        %v775 = vld [vmem:[#allocation9 + $0x440] sm:$0xff]
        %v776 = vld [vmem:[#allocation9 + $0x448] sm:$0xff]
        %v777 = vld [vmem:[#allocation9 + $0x450] sm:$0xff]
        %v778 = vld [vmem:[#allocation9 + $0x458] sm:$0xff]
        %v779 = vld [vmem:[#allocation9 + $0x460] sm:$0xff]
        %v780 = vld [vmem:[#allocation9 + $0x468] sm:$0xff]
        %v781 = vld [vmem:[#allocation9 + $0x470] sm:$0xff]
        %v782 = vld [vmem:[#allocation9 + $0x478] sm:$0xff]
        %v783 = vld [vmem:[#allocation9 + $0x480] sm:$0xff]
        %v784 = vld [vmem:[#allocation9 + $0x488] sm:$0xff]
        %v785 = vld [vmem:[#allocation9 + $0x490] sm:$0xff]
        %v786 = vld [vmem:[#allocation9 + $0x498] sm:$0xff]
        %v787 = vld [vmem:[#allocation9 + $0x4a0] sm:$0xff]
        %v788 = vld [vmem:[#allocation9 + $0x4a8] sm:$0xff]
        %v789 = vld [vmem:[#allocation9 + $0x4b0] sm:$0xff]
        %v790 = vld [vmem:[#allocation9 + $0x4b8] sm:$0xff]
        %v791 = vld [vmem:[#allocation9 + $0x4c0] sm:$0xff]
        %v792 = vld [vmem:[#allocation9 + $0x4c8] sm:$0xff]
        %v793 = vld [vmem:[#allocation9 + $0x4d0] sm:$0xff]
        %v794 = vld [vmem:[#allocation9 + $0x4d8] sm:$0xff]
        %v795 = vld [vmem:[#allocation9 + $0x4e0] sm:$0xff]
        %v796 = vld [vmem:[#allocation9 + $0x4e8] sm:$0xff]
        %v797 = vld [vmem:[#allocation9 + $0x4f0] sm:$0xff]
        %v798 = vld [vmem:[#allocation9 + $0x4f8] sm:$0xff]
        %v799 = vld [vmem:[#allocation9 + $0x500] sm:$0xff]
        %v800 = vld [vmem:[#allocation9 + $0x508] sm:$0xff]
        %v801 = vld [vmem:[#allocation9 + $0x510] sm:$0xff]
        %v802 = vld [vmem:[#allocation9 + $0x518] sm:$0xff]
        %v803 = vld [vmem:[#allocation9 + $0x520] sm:$0xff]
        %v804 = vld [vmem:[#allocation9 + $0x528] sm:$0xff]
        %v805 = vld [vmem:[#allocation9 + $0x530] sm:$0xff]
        %v806 = vld [vmem:[#allocation9 + $0x538] sm:$0xff]
        %v807 = vld [vmem:[#allocation9 + $0x540] sm:$0xff]
        %v808 = vld [vmem:[#allocation9 + $0x548] sm:$0xff]
        %v809 = vld [vmem:[#allocation9 + $0x550] sm:$0xff]
        %v810 = vld [vmem:[#allocation9 + $0x558] sm:$0xff]
        %v811 = vld [vmem:[#allocation9 + $0x560] sm:$0xff]
        %v812 = vld [vmem:[#allocation9 + $0x568] sm:$0xff]
        %v813 = vld [vmem:[#allocation9 + $0x570] sm:$0xff]
        %v814 = vld [vmem:[#allocation9 + $0x578] sm:$0xff]
        %v815 = vld [vmem:[#allocation9 + $0x580] sm:$0xff]
        %v816 = vld [vmem:[#allocation9 + $0x588] sm:$0xff]
        %v817 = vld [vmem:[#allocation9 + $0x590] sm:$0xff]
        %v818 = vld [vmem:[#allocation9 + $0x598] sm:$0xff]
        %v819 = vld [vmem:[#allocation9 + $0x5a0] sm:$0xff]
        %v820 = vld [vmem:[#allocation9 + $0x5a8] sm:$0xff]
        %v821 = vld [vmem:[#allocation9 + $0x5b0] sm:$0xff]
        %v822 = vld [vmem:[#allocation9 + $0x5b8] sm:$0xff]
        %v823 = vld [vmem:[#allocation9 + $0x5c0] sm:$0xff]
        %v824 = vld [vmem:[#allocation9 + $0x5c8] sm:$0xff]
        %v825 = vld [vmem:[#allocation9 + $0x5d0] sm:$0xff]
        %v826 = vld [vmem:[#allocation9 + $0x5d8] sm:$0xff]
        %v827 = vld [vmem:[#allocation9 + $0x5e0] sm:$0xff]
        %v828 = vld [vmem:[#allocation9 + $0x5e8] sm:$0xff]
        %v829 = vld [vmem:[#allocation9 + $0x5f0] sm:$0xff]
        %v830 = vld [vmem:[#allocation9 + $0x5f8] sm:$0xff]
        %v831 = vld [vmem:[#allocation9 + $0x600] sm:$0xff]
        %v832 = vld [vmem:[#allocation9 + $0x608] sm:$0xff]
        %v833 = vld [vmem:[#allocation9 + $0x610] sm:$0xff]
        %v834 = vld [vmem:[#allocation9 + $0x618] sm:$0xff]
        %v835 = vld [vmem:[#allocation9 + $0x620] sm:$0xff]
        %v836 = vld [vmem:[#allocation9 + $0x628] sm:$0xff]
        %v837 = vld [vmem:[#allocation9 + $0x630] sm:$0xff]
        %v838 = vld [vmem:[#allocation9 + $0x638] sm:$0xff]
        %v839 = vld [vmem:[#allocation9 + $0x640] sm:$0xff]
        %v840 = vld [vmem:[#allocation9 + $0x648] sm:$0xff]
        %v841 = vld [vmem:[#allocation9 + $0x650] sm:$0xff]
        %v842 = vld [vmem:[#allocation9 + $0x658] sm:$0xff]
        %v843 = vld [vmem:[#allocation9 + $0x660] sm:$0xff]
        %v844 = vld [vmem:[#allocation9 + $0x668] sm:$0xff]
        %v845 = vld [vmem:[#allocation9 + $0x670] sm:$0xff]
        %v846 = vld [vmem:[#allocation9 + $0x678] sm:$0xff]
        %v847 = vld [vmem:[#allocation9 + $0x680] sm:$0xff]
        %v848 = vld [vmem:[#allocation9 + $0x688] sm:$0xff]
        %v849 = vld [vmem:[#allocation9 + $0x690] sm:$0xff]
        %v850 = vld [vmem:[#allocation9 + $0x698] sm:$0xff]
        %v851 = vld [vmem:[#allocation9 + $0x6a0] sm:$0xff]
        %v852 = vld [vmem:[#allocation9 + $0x6a8] sm:$0xff]
        %v853 = vld [vmem:[#allocation9 + $0x6b0] sm:$0xff]
        %v854 = vld [vmem:[#allocation9 + $0x6b8] sm:$0xff]
        %v855 = vld [vmem:[#allocation9 + $0x6c0] sm:$0xff]
        %v856 = vld [vmem:[#allocation9 + $0x6c8] sm:$0xff]
        %v857 = vld [vmem:[#allocation9 + $0x6d0] sm:$0xff]
        %v858 = vld [vmem:[#allocation9 + $0x6d8] sm:$0xff]
        %v859 = vld [vmem:[#allocation9 + $0x6e0] sm:$0xff]
        %v860 = vld [vmem:[#allocation9 + $0x6e8] sm:$0xff]
        %v861 = vld [vmem:[#allocation9 + $0x6f0] sm:$0xff]
        %v862 = vld [vmem:[#allocation9 + $0x6f8] sm:$0xff]
        %v863 = vld [vmem:[#allocation9 + $0x700] sm:$0xff]
        %v864 = vld [vmem:[#allocation9 + $0x708] sm:$0xff]
        %v865 = vld [vmem:[#allocation9 + $0x710] sm:$0xff]
        %v866 = vld [vmem:[#allocation9 + $0x718] sm:$0xff]
        %v867 = vld [vmem:[#allocation9 + $0x720] sm:$0xff]
        %v868 = vld [vmem:[#allocation9 + $0x728] sm:$0xff]
        %v869 = vld [vmem:[#allocation9 + $0x730] sm:$0xff]
        %v870 = vld [vmem:[#allocation9 + $0x738] sm:$0xff]
        %v871 = vld [vmem:[#allocation9 + $0x740] sm:$0xff]
        %v872 = vld [vmem:[#allocation9 + $0x748] sm:$0xff]
        %v873 = vld [vmem:[#allocation9 + $0x750] sm:$0xff]
        %v874 = vld [vmem:[#allocation9 + $0x758] sm:$0xff]
        %v875 = vld [vmem:[#allocation9 + $0x760] sm:$0xff]
        %v876 = vld [vmem:[#allocation9 + $0x768] sm:$0xff]
        %v877 = vld [vmem:[#allocation9 + $0x770] sm:$0xff]
        %v878 = vld [vmem:[#allocation9 + $0x778] sm:$0xff]
        %v879 = vld [vmem:[#allocation9 + $0x780] sm:$0xff]
        %v880 = vld [vmem:[#allocation9 + $0x788] sm:$0xff]
        %v881 = vld [vmem:[#allocation9 + $0x790] sm:$0xff]
        %v882 = vld [vmem:[#allocation9 + $0x798] sm:$0xff]
        %v883 = vld [vmem:[#allocation9 + $0x7a0] sm:$0xff]
        %v884 = vld [vmem:[#allocation9 + $0x7a8] sm:$0xff]
        %v885 = vld [vmem:[#allocation9 + $0x7b0] sm:$0xff]
        %v886 = vld [vmem:[#allocation9 + $0x7b8] sm:$0xff]
        %v887 = vld [vmem:[#allocation9 + $0x7c0] sm:$0xff]
        %v888 = vld [vmem:[#allocation9 + $0x7c8] sm:$0xff]
        %v889 = vld [vmem:[#allocation9 + $0x7d0] sm:$0xff]
        %v890 = vld [vmem:[#allocation9 + $0x7d8] sm:$0xff]
        %v891 = vld [vmem:[#allocation9 + $0x7e0] sm:$0xff]
        %v892 = vld [vmem:[#allocation9 + $0x7e8] sm:$0xff]
        %v893 = vld [vmem:[#allocation9 + $0x7f0] sm:$0xff]
        %v894 = vld [vmem:[#allocation9 + $0x7f8] sm:$0xff]
        %v895 = vld [vmem:[#allocation11] sm:$0xf]
        %v897 = vperm.slane %v895, 0
        %v898 = vperm.slane %v895, 1
        %v899 = vperm.slane %v895, 2
        %v900 = vperm.slane %v895, 3
        %905 = vmatpush.msra.mxu0 %v699
        %906 = vmatpush.msra.mxu0 %v695
        %907 = vmatpush.msra.mxu0 %v691
        %908 = vmatpush.msra.mxu0 %v687
        %909 = vmatpush.msra.mxu0 %v683
        %910 = vmatpush.msra.mxu0 %v679
        %911 = vmatpush.msra.mxu0 %v675
        %912 = vmatpush.msra.mxu0 %v671
        %913 = vmatpush.msra.mxu0 %v667
        %914 = vmatpush.msra.mxu0 %v663
        %915 = vmatpush.msra.mxu0 %v659
        %916 = vmatpush.msra.mxu0 %v655
        %917 = vmatpush.msra.mxu0 %v651
        %918 = vmatpush.msra.mxu0 %v647
        %919 = vmatpush.msra.mxu0 %v643
        %920 = vmatpush.msra.mxu0 %v639
        %921 = vmatmul.f32.gmra.mxu0 %v635
        %v922 = vpop.f32.mrf.mxu0
        %v923 = vadd.f32 %v897, %v922
        %924 = vdwg.mxu0
        %925 = vmatpush.msra.mxu0 %v763
        %926 = vmatpush.msra.mxu0 %v759
        %927 = vmatpush.msra.mxu0 %v755
        %928 = vmatpush.msra.mxu0 %v751
        %929 = vmatpush.msra.mxu0 %v747
        %930 = vmatpush.msra.mxu0 %v743
        %931 = vmatpush.msra.mxu0 %v739
        %932 = vmatpush.msra.mxu0 %v735
        %933 = vmatpush.msra.mxu0 %v731
        %934 = vmatpush.msra.mxu0 %v727
        %935 = vmatpush.msra.mxu0 %v723
        %936 = vmatpush.msra.mxu0 %v719
        %937 = vmatpush.msra.mxu0 %v715
        %938 = vmatpush.msra.mxu0 %v711
        %939 = vmatpush.msra.mxu0 %v707
        %940 = vmatpush.msra.mxu0 %v703
        %941 = vmatmul.f32.gmra.mxu0 %v636
        %v942 = vpop.f32.mrf.mxu0
        %v943 = vadd.f32 %v923, %v942
        %944 = vdwg.mxu0
        %945 = vmatpush.msra.mxu0 %v827
        %946 = vmatpush.msra.mxu0 %v823
        %947 = vmatpush.msra.mxu0 %v819
        %948 = vmatpush.msra.mxu0 %v815
        %949 = vmatpush.msra.mxu0 %v811
        %950 = vmatpush.msra.mxu0 %v807
        %951 = vmatpush.msra.mxu0 %v803
        %952 = vmatpush.msra.mxu0 %v799
        %953 = vmatpush.msra.mxu0 %v795
        %954 = vmatpush.msra.mxu0 %v791
        %955 = vmatpush.msra.mxu0 %v787
        %956 = vmatpush.msra.mxu0 %v783
        %957 = vmatpush.msra.mxu0 %v779
        %958 = vmatpush.msra.mxu0 %v775
        %959 = vmatpush.msra.mxu0 %v771
        %960 = vmatpush.msra.mxu0 %v767
        %961 = vmatmul.f32.gmra.mxu0 %v637
        %v962 = vpop.f32.mrf.mxu0
        %v963 = vadd.f32 %v943, %v962
        %964 = vdwg.mxu0
        %965 = vmatpush.msra.mxu0 %v891
        %966 = vmatpush.msra.mxu0 %v887
        %967 = vmatpush.msra.mxu0 %v883
        %968 = vmatpush.msra.mxu0 %v879
        %969 = vmatpush.msra.mxu0 %v875
        %970 = vmatpush.msra.mxu0 %v871
        %971 = vmatpush.msra.mxu0 %v867
        %972 = vmatpush.msra.mxu0 %v863
        %973 = vmatpush.msra.mxu0 %v859
        %974 = vmatpush.msra.mxu0 %v855
        %975 = vmatpush.msra.mxu0 %v851
        %976 = vmatpush.msra.mxu0 %v847
        %977 = vmatpush.msra.mxu0 %v843
        %978 = vmatpush.msra.mxu0 %v839
        %979 = vmatpush.msra.mxu0 %v835
        %980 = vmatpush.msra.mxu0 %v831
        %981 = vmatmul.f32.gmra.mxu0 %v638
        %v982 = vpop.f32.mrf.mxu0
        %v983 = vadd.f32 %v963, %v982
        %984 = vdwg.mxu0
        %985 = vmatpush.msra.mxu0 %v700
        %986 = vmatpush.msra.mxu0 %v696
        %987 = vmatpush.msra.mxu0 %v692
        %988 = vmatpush.msra.mxu0 %v688
        %989 = vmatpush.msra.mxu0 %v684
        %990 = vmatpush.msra.mxu0 %v680
        %991 = vmatpush.msra.mxu0 %v676
        %992 = vmatpush.msra.mxu0 %v672
        %993 = vmatpush.msra.mxu0 %v668
        %994 = vmatpush.msra.mxu0 %v664
        %995 = vmatpush.msra.mxu0 %v660
        %996 = vmatpush.msra.mxu0 %v656
        %997 = vmatpush.msra.mxu0 %v652
        %998 = vmatpush.msra.mxu0 %v648
        %999 = vmatpush.msra.mxu0 %v644
        %1000 = vmatpush.msra.mxu0 %v640
        %1001 = vmatmul.f32.gmra.mxu0 %v635
        %v1002 = vpop.f32.mrf.mxu0
        %v1003 = vadd.f32 %v898, %v1002
        %1004 = vdwg.mxu0
        %1005 = vmatpush.msra.mxu0 %v764
        %1006 = vmatpush.msra.mxu0 %v760
        %1007 = vmatpush.msra.mxu0 %v756
        %1008 = vmatpush.msra.mxu0 %v752
        %1009 = vmatpush.msra.mxu0 %v748
        %1010 = vmatpush.msra.mxu0 %v744
        %1011 = vmatpush.msra.mxu0 %v740
        %1012 = vmatpush.msra.mxu0 %v736
        %1013 = vmatpush.msra.mxu0 %v732
        %1014 = vmatpush.msra.mxu0 %v728
        %1015 = vmatpush.msra.mxu0 %v724
        %1016 = vmatpush.msra.mxu0 %v720
        %1017 = vmatpush.msra.mxu0 %v716
        %1018 = vmatpush.msra.mxu0 %v712
        %1019 = vmatpush.msra.mxu0 %v708
        %1020 = vmatpush.msra.mxu0 %v704
        %1021 = vmatmul.f32.gmra.mxu0 %v636
        %v1022 = vpop.f32.mrf.mxu0
        %v1023 = vadd.f32 %v1003, %v1022
        %1024 = vdwg.mxu0
        %1025 = vmatpush.msra.mxu0 %v828
        %1026 = vmatpush.msra.mxu0 %v824
        %1027 = vmatpush.msra.mxu0 %v820
        %1028 = vmatpush.msra.mxu0 %v816
        %1029 = vmatpush.msra.mxu0 %v812
        %1030 = vmatpush.msra.mxu0 %v808
        %1031 = vmatpush.msra.mxu0 %v804
        %1032 = vmatpush.msra.mxu0 %v800
        %1033 = vmatpush.msra.mxu0 %v796
        %1034 = vmatpush.msra.mxu0 %v792
        %1035 = vmatpush.msra.mxu0 %v788
        %1036 = vmatpush.msra.mxu0 %v784
        %1037 = vmatpush.msra.mxu0 %v780
        %1038 = vmatpush.msra.mxu0 %v776
        %1039 = vmatpush.msra.mxu0 %v772
        %1040 = vmatpush.msra.mxu0 %v768
        %1041 = vmatmul.f32.gmra.mxu0 %v637
        %v1042 = vpop.f32.mrf.mxu0
        %v1043 = vadd.f32 %v1023, %v1042
        %1044 = vdwg.mxu0
        %1045 = vmatpush.msra.mxu0 %v892
        %1046 = vmatpush.msra.mxu0 %v888
        %1047 = vmatpush.msra.mxu0 %v884
        %1048 = vmatpush.msra.mxu0 %v880
        %1049 = vmatpush.msra.mxu0 %v876
        %1050 = vmatpush.msra.mxu0 %v872
        %1051 = vmatpush.msra.mxu0 %v868
        %1052 = vmatpush.msra.mxu0 %v864
        %1053 = vmatpush.msra.mxu0 %v860
        %1054 = vmatpush.msra.mxu0 %v856
        %1055 = vmatpush.msra.mxu0 %v852
        %1056 = vmatpush.msra.mxu0 %v848
        %1057 = vmatpush.msra.mxu0 %v844
        %1058 = vmatpush.msra.mxu0 %v840
        %1059 = vmatpush.msra.mxu0 %v836
        %1060 = vmatpush.msra.mxu0 %v832
        %1061 = vmatmul.f32.gmra.mxu0 %v638
        %v1062 = vpop.f32.mrf.mxu0
        %v1063 = vadd.f32 %v1043, %v1062
        %1064 = vdwg.mxu0
        %1065 = vmatpush.msra.mxu0 %v701
        %1066 = vmatpush.msra.mxu0 %v697
        %1067 = vmatpush.msra.mxu0 %v693
        %1068 = vmatpush.msra.mxu0 %v689
        %1069 = vmatpush.msra.mxu0 %v685
        %1070 = vmatpush.msra.mxu0 %v681
        %1071 = vmatpush.msra.mxu0 %v677
        %1072 = vmatpush.msra.mxu0 %v673
        %1073 = vmatpush.msra.mxu0 %v669
        %1074 = vmatpush.msra.mxu0 %v665
        %1075 = vmatpush.msra.mxu0 %v661
        %1076 = vmatpush.msra.mxu0 %v657
        %1077 = vmatpush.msra.mxu0 %v653
        %1078 = vmatpush.msra.mxu0 %v649
        %1079 = vmatpush.msra.mxu0 %v645
        %1080 = vmatpush.msra.mxu0 %v641
        %1081 = vmatmul.f32.gmra.mxu0 %v635
        %v1082 = vpop.f32.mrf.mxu0
        %v1083 = vadd.f32 %v899, %v1082
        %1084 = vdwg.mxu0
        %1085 = vmatpush.msra.mxu0 %v765
        %1086 = vmatpush.msra.mxu0 %v761
        %1087 = vmatpush.msra.mxu0 %v757
        %1088 = vmatpush.msra.mxu0 %v753
        %1089 = vmatpush.msra.mxu0 %v749
        %1090 = vmatpush.msra.mxu0 %v745
        %1091 = vmatpush.msra.mxu0 %v741
        %1092 = vmatpush.msra.mxu0 %v737
        %1093 = vmatpush.msra.mxu0 %v733
        %1094 = vmatpush.msra.mxu0 %v729
        %1095 = vmatpush.msra.mxu0 %v725
        %1096 = vmatpush.msra.mxu0 %v721
        %1097 = vmatpush.msra.mxu0 %v717
        %1098 = vmatpush.msra.mxu0 %v713
        %1099 = vmatpush.msra.mxu0 %v709
        %1100 = vmatpush.msra.mxu0 %v705
        %1101 = vmatmul.f32.gmra.mxu0 %v636
        %v1102 = vpop.f32.mrf.mxu0
        %v1103 = vadd.f32 %v1083, %v1102
        %1104 = vdwg.mxu0
        %1105 = vmatpush.msra.mxu0 %v829
        %1106 = vmatpush.msra.mxu0 %v825
        %1107 = vmatpush.msra.mxu0 %v821
        %1108 = vmatpush.msra.mxu0 %v817
        %1109 = vmatpush.msra.mxu0 %v813
        %1110 = vmatpush.msra.mxu0 %v809
        %1111 = vmatpush.msra.mxu0 %v805
        %1112 = vmatpush.msra.mxu0 %v801
        %1113 = vmatpush.msra.mxu0 %v797
        %1114 = vmatpush.msra.mxu0 %v793
        %1115 = vmatpush.msra.mxu0 %v789
        %1116 = vmatpush.msra.mxu0 %v785
        %1117 = vmatpush.msra.mxu0 %v781
        %1118 = vmatpush.msra.mxu0 %v777
        %1119 = vmatpush.msra.mxu0 %v773
        %1120 = vmatpush.msra.mxu0 %v769
        %1121 = vmatmul.f32.gmra.mxu0 %v637
        %v1122 = vpop.f32.mrf.mxu0
        %v1123 = vadd.f32 %v1103, %v1122
        %1124 = vdwg.mxu0
        %1125 = vmatpush.msra.mxu0 %v893
        %1126 = vmatpush.msra.mxu0 %v889
        %1127 = vmatpush.msra.mxu0 %v885
        %1128 = vmatpush.msra.mxu0 %v881
        %1129 = vmatpush.msra.mxu0 %v877
        %1130 = vmatpush.msra.mxu0 %v873
        %1131 = vmatpush.msra.mxu0 %v869
        %1132 = vmatpush.msra.mxu0 %v865
        %1133 = vmatpush.msra.mxu0 %v861
        %1134 = vmatpush.msra.mxu0 %v857
        %1135 = vmatpush.msra.mxu0 %v853
        %1136 = vmatpush.msra.mxu0 %v849
        %1137 = vmatpush.msra.mxu0 %v845
        %1138 = vmatpush.msra.mxu0 %v841
        %1139 = vmatpush.msra.mxu0 %v837
        %1140 = vmatpush.msra.mxu0 %v833
        %1141 = vmatmul.f32.gmra.mxu0 %v638
        %v1142 = vpop.f32.mrf.mxu0
        %v1143 = vadd.f32 %v1123, %v1142
        %1144 = vdwg.mxu0
        %1145 = vmatpush.msra.mxu0 %v702
        %1146 = vmatpush.msra.mxu0 %v698
        %1147 = vmatpush.msra.mxu0 %v694
        %1148 = vmatpush.msra.mxu0 %v690
        %1149 = vmatpush.msra.mxu0 %v686
        %1150 = vmatpush.msra.mxu0 %v682
        %1151 = vmatpush.msra.mxu0 %v678
        %1152 = vmatpush.msra.mxu0 %v674
        %1153 = vmatpush.msra.mxu0 %v670
        %1154 = vmatpush.msra.mxu0 %v666
        %1155 = vmatpush.msra.mxu0 %v662
        %1156 = vmatpush.msra.mxu0 %v658
        %1157 = vmatpush.msra.mxu0 %v654
        %1158 = vmatpush.msra.mxu0 %v650
        %1159 = vmatpush.msra.mxu0 %v646
        %1160 = vmatpush.msra.mxu0 %v642
        %1161 = vmatmul.f32.gmra.mxu0 %v635
        %v1162 = vpop.f32.mrf.mxu0
        %v1163 = vadd.f32 %v900, %v1162
        %1164 = vdwg.mxu0
        %1165 = vmatpush.msra.mxu0 %v766
        %1166 = vmatpush.msra.mxu0 %v762
        %1167 = vmatpush.msra.mxu0 %v758
        %1168 = vmatpush.msra.mxu0 %v754
        %1169 = vmatpush.msra.mxu0 %v750
        %1170 = vmatpush.msra.mxu0 %v746
        %1171 = vmatpush.msra.mxu0 %v742
        %1172 = vmatpush.msra.mxu0 %v738
        %1173 = vmatpush.msra.mxu0 %v734
        %1174 = vmatpush.msra.mxu0 %v730
        %1175 = vmatpush.msra.mxu0 %v726
        %1176 = vmatpush.msra.mxu0 %v722
        %1177 = vmatpush.msra.mxu0 %v718
        %1178 = vmatpush.msra.mxu0 %v714
        %1179 = vmatpush.msra.mxu0 %v710
        %1180 = vmatpush.msra.mxu0 %v706
        %1181 = vmatmul.f32.gmra.mxu0 %v636
        %v1182 = vpop.f32.mrf.mxu0
        %v1183 = vadd.f32 %v1163, %v1182
        %1184 = vdwg.mxu0
        %1185 = vmatpush.msra.mxu0 %v830
        %1186 = vmatpush.msra.mxu0 %v826
        %1187 = vmatpush.msra.mxu0 %v822
        %1188 = vmatpush.msra.mxu0 %v818
        %1189 = vmatpush.msra.mxu0 %v814
        %1190 = vmatpush.msra.mxu0 %v810
        %1191 = vmatpush.msra.mxu0 %v806
        %1192 = vmatpush.msra.mxu0 %v802
        %1193 = vmatpush.msra.mxu0 %v798
        %1194 = vmatpush.msra.mxu0 %v794
        %1195 = vmatpush.msra.mxu0 %v790
        %1196 = vmatpush.msra.mxu0 %v786
        %1197 = vmatpush.msra.mxu0 %v782
        %1198 = vmatpush.msra.mxu0 %v778
        %1199 = vmatpush.msra.mxu0 %v774
        %1200 = vmatpush.msra.mxu0 %v770
        %1201 = vmatmul.f32.gmra.mxu0 %v637
        %v1202 = vpop.f32.mrf.mxu0
        %v1203 = vadd.f32 %v1183, %v1202
        %1204 = vdwg.mxu0
        %1205 = vmatpush.msra.mxu0 %v894
        %1206 = vmatpush.msra.mxu0 %v890
        %1207 = vmatpush.msra.mxu0 %v886
        %1208 = vmatpush.msra.mxu0 %v882
        %1209 = vmatpush.msra.mxu0 %v878
        %1210 = vmatpush.msra.mxu0 %v874
        %1211 = vmatpush.msra.mxu0 %v870
        %1212 = vmatpush.msra.mxu0 %v866
        %1213 = vmatpush.msra.mxu0 %v862
        %1214 = vmatpush.msra.mxu0 %v858
        %1215 = vmatpush.msra.mxu0 %v854
        %1216 = vmatpush.msra.mxu0 %v850
        %1217 = vmatpush.msra.mxu0 %v846
        %1218 = vmatpush.msra.mxu0 %v842
        %1219 = vmatpush.msra.mxu0 %v838
        %1220 = vmatpush.msra.mxu0 %v834
        %1221 = vmatmul.f32.gmra.mxu0 %v638
        %v1222 = vpop.f32.mrf.mxu0
        %v1223 = vadd.f32 %v1203, %v1222
        %1224 = vdwg.mxu0
        %v1225 = vmax.f32 %v983, 0.0
        %v1226 = vmax.f32 %v1063, 0.0
        %v1227 = vmax.f32 %v1143, 0.0
        %v1228 = vmax.f32 %v1223, 0.0
        %1230 = vrot.lane.b32.xlu0 %v1225, 64
        %v1231 = vpop.permute.xlu0 %1230
        %v1233 = vmax.f32 %v1225, %v1231
        %v1234 = vmax.f32 %v1233, %v1226
        %1236 = vrot.lane.b32.xlu0 %v1226, 64
        %v1237 = vpop.permute.xlu0 %1236
        %v1239 = vmax.f32 %v1234, %v1237
        %v1240 = vmax.f32 %v1239, %v1227
        %1242 = vrot.lane.b32.xlu0 %v1227, 64
        %v1243 = vpop.permute.xlu0 %1242
        %v1245 = vmax.f32 %v1240, %v1243
        %v1246 = vmax.f32 %v1245, %v1228
        %1248 = vrot.lane.b32.xlu0 %v1228, 64
        %v1249 = vpop.permute.xlu0 %1248
        %v1251 = vmax.f32 %v1246, %v1249
        %v1252 = vld [vmem:[%s6] sm:$0x1]
        %v1253 = vld [vmem:[#allocation2] sm:$0x1]
        %s1254 = vtos %v1253
        %v1255 = vstv %s1254
        %v1257 = vsel %vm421, %v1252, 0
        %v1260 = vsel %vm421, %v1251, 0
        %1262 = vmatpush.xpose.msra.mxu0 0.0
        %1263 = vmatpush.xpose.msra.mxu0 0.0
        %1264 = vmatpush.xpose.msra.mxu0 0.0
        %1265 = vmatpush.xpose.msra.mxu0 0.0
        %1266 = vmatpush.xpose.msra.mxu0 0.0
        %1267 = vmatpush.xpose.msra.mxu0 0.0
        %1268 = vmatpush.xpose.msra.mxu0 0.0
        %1269 = vmatpush.xpose.msra.mxu0 0.0
        %1270 = vmatpush.xpose.msra.mxu0 0.0
        %1271 = vmatpush.xpose.msra.mxu0 0.0
        %1272 = vmatpush.xpose.msra.mxu0 0.0
        %1273 = vmatpush.xpose.msra.mxu0 0.0
        %1274 = vmatpush.xpose.msra.mxu0 0.0
        %1275 = vmatpush.xpose.msra.mxu0 0.0
        %1276 = vmatpush.xpose.msra.mxu0 0.0
        %1277 = vmatpush.xpose.msra.mxu0 %v1260
        %1278 = vmatmul.f32.gmra.mxu0 %v1257
        %v1279 = vpop.f32.mrf.mxu0
        %v1280 = vadd.f32 %v1255, %v1279
        %1281 = vdwg.mxu0
        %v1282 = vsub.f32 0.0, %v1280
        %v1283 = vmul.f32 %v1282, 1.442695
        %v1284 = vpow.pop %v1283
        %v1285 = vadd.f32 %v1284, 1.0
        %v1286 = vrcp.pop %v1285
        %v1287 = vmul.f32 %v1285, %v1286
        %v1288 = vsub.f32 1.0, %v1287
        %v1289 = vmul.f32 %v1286, %v1288
        %v1290 = vadd.f32 %v1286, %v1289
        %vm1291 = vweird.f32 %v1285
        %vm1292 = vweird.f32 %v1286
        %vm1293 = vmor %vm1291, %vm1292
        %v1294 = vsel %vm1293, %v1286, %v1290
        %v1295 = vand.u32 2147483647, %v1285
        %vm1296 = vcmp.eq.f32.partialorder %v1295, 8.507059e+37
        %v1297 = vand.u32 %v1285, 2147483648
        %v1298 = vor.u32 1.1754944e-38, %v1297
        %v1299 = vsel %vm1296, %v1298, %v1294
        %v1300 = vmul.f32 1.0, %v1299
        %vm1301 = vcmask 57344
        %1302 = vst.msk [vmem:[%s387] sm:$0x1] %vm1301, %v1300
        %s1303 = sand.u32 %s210, 1
        %s1304 = scalar_lea.sflag [#allocation5], %s1303
        %s1305 = sand.u32 %s210, 1
        %s1306 = scalar_lea.vmem [#allocation12], %s1305
        // Predicated region
        $region73: #{tpu_custom_call.1} parent=51 // pred_check
          %p1307 = pneg %p220
        $region74: #{tpu_custom_call.1} parent=51 // pred_check_branch
          %1309 = sbr.rel (%p1307) target = $region76
        $region75: #{tpu_custom_call.1} parent=51 // pred_region
          %1311 = vsyncadd %s1304, 0
          %s1312 = scalar_lea.hbm %s8, %s29
          %s1314 = sshll.u32 %s1306, 4
          %s1315 = int_to_ptr.vmem [resolvable:$true] %s1314
          %s1316 = sshll.u32 %s1312, 4
          %s1317 = int_to_ptr.hbm [resolvable:$true] %s1316
          %1319 = dma.vmem_to_hbm [thread:$0]  %s1315, 16, %s1317, %s1304
        $region76: #{tpu_custom_call.1} parent=51 // pred_fallthru
          _
      $region52: #{tpu_custom_call.1} parent=5 // pred_fallthru
        _
      %p1320 = scmp.le.s32.totalorder 2, %s24
      // Predicated region
      $region77: #{tpu_custom_call.1} parent=5 // pred_check
        %p1321 = pneg %p1320
      $region78: #{tpu_custom_call.1} parent=5 // pred_check_branch
        %1323 = sbr.rel (%p1321) target = $region80
      $region79: #{tpu_custom_call.1} parent=5 // pred_region
        %s1324 = ssub.s32 %s24, 2
        // Predicated region
        $region81: #{tpu_custom_call.1} parent=79 // pred_check
          %p1325 = pneg %p226
        $region82: #{tpu_custom_call.1} parent=79 // pred_check_branch
          %1327 = sbr.rel (%p1325) target = $region84
        $region83: #{tpu_custom_call.1} parent=79 // pred_region
          %s1328 = sand.u32 %s211, 1
          %s1329 = scalar_lea.sflag [#allocation5], %s1328
          %s1330 = sand.u32 %s211, 1
          %s1331 = scalar_lea.vmem [#allocation12], %s1330
          %1333 = dma.done %s1329, 16
        $region84: #{tpu_custom_call.1} parent=79 // pred_fallthru
          _
      $region80: #{tpu_custom_call.1} parent=5 // pred_fallthru
        _
    $region6: #{tpu_custom_call.1} parent=1 // loop_footer
      %s28 = sadd.s32 1, %s24
    $region7: #{tpu_custom_call.1} parent=1 // loop_footer_branch
      %23 = sbr.rel target = $region3
    $region8: #{tpu_custom_call.1} parent=1 // loop_exit
      _
    %1334 = vsyncpa [#allocation4], 1
    %s1335 = scalar_lea.sflag [#allocation4], 1
    %1336 = vsyncpa %s1335, 1
    %1337 = vsyncpa [#allocation7], 1
    %1338 = vsyncpa [#allocation10], 1
    %1339 = vsyncpa [#allocation5], 1
    %s1340 = scalar_lea.sflag [#allocation5], 1
    %1341 = vsyncpa %s1340, 1

</llo_original>
